<compile_context>
chip_gen: v7x
topology: tpu7x:2x2x1
jax: 0.10.0
libtpu: 0.0.40
codegen_flags: <defaults>
</compile_context>

<pallas_src>
import functools

import jax
import jax.numpy as jnp
from jax.experimental import pallas as pl
from jax.experimental.pallas import tpu as pltpu

_LANE = 128
_SUBLANE = 8
_MIB = 1024 * 1024


def _cdiv(a, b):
    return -(-a // b)


def _round_up(x, m):
    return _cdiv(x, m) * m


# ---------------------------------------------------------------------------
# Kernel
# ---------------------------------------------------------------------------
def _policy_value_kernel(x_ref,
                         wp_ref, bp_ref,
                         w1_ref, b1_ref,
                         w2_ref, b2_ref,
                         wh_ref, bh_ref,
                         action_ref, value_ref):
    # Weights arrive pre-transposed/padded as [in, out]; every matmul is a plain x @ W on
    # the MXU with f32 accumulation. Bias add / ReLU stay f32 on the VPU (v5e-safe).
    x = x_ref[...].astype(wp_ref.dtype)

    # action = policy(x)
    action = jnp.dot(x, wp_ref[...], preferred_element_type=jnp.float32) + bp_ref[...]
    action_ref[...] = action.astype(action_ref.dtype)

    # h = relu(value1(action))
    h = jnp.dot(action.astype(w1_ref.dtype), w1_ref[...],
                preferred_element_type=jnp.float32) + b1_ref[...]
    h = jnp.maximum(h, 0.0)

    # h = relu(value2(h))
    h = jnp.dot(h.astype(w2_ref.dtype), w2_ref[...],
                preferred_element_type=jnp.float32) + b2_ref[...]
    h = jnp.maximum(h, 0.0)

    # value = value_head(h): wh is padded to a 128-wide slab for the MXU but only column 0
    # is real; store just that column so value HBM writeback is tb*4 bytes per step
    # instead of a full 128-wide f32 slab (~128x less write traffic).
    value = jnp.dot(h.astype(wh_ref.dtype), wh_ref[...],
                    preferred_element_type=jnp.float32) + bh_ref[...]
    value_ref[...] = value[:, :1].astype(value_ref.dtype)


# ---------------------------------------------------------------------------
# One-time parameter preparation (hoisted out of the per-call path)
# ---------------------------------------------------------------------------
def prepare_params(params, *, use_bf16=True):
    """Transpose weights to [in, out], zero-pad to lane width (128), cast once.

    Accepts PyTorch-style shapes: weight [out, in], bias [out] or [1, out].
    Returns (weights_dict, dims) to pass to policy_value_forward.
    """
    wp = jnp.asarray(params["wp"], jnp.float32)
    w1 = jnp.asarray(params["w1"], jnp.float32)
    w2 = jnp.asarray(params["w2"], jnp.float32)
    wh = jnp.asarray(params["wh"], jnp.float32)

    num_outputs, num_inputs = wp.shape
    num_hidden = w1.shape[0]
    # Module quirk: value1 consumes `action`, so its in_features must equal num_outputs.
    assert num_inputs == num_outputs, "Policy_value requires num_inputs == num_outputs"
    assert w1.shape == (num_hidden, num_inputs)
    assert w2.shape == (num_hidden, num_hidden)
    assert wh.shape == (1, num_hidden)

    in_p = _round_up(num_inputs, _LANE)
    out_p = _round_up(num_outputs, _LANE)
    hid_p = _round_up(num_hidden, _LANE)
    val_p = _LANE  # value head padded to one lane group for the MXU

    mm_dtype = jnp.bfloat16 if use_bf16 else jnp.float32

    def prep_w(w, in_pad, out_pad):
        wt = w.T  # [in, out] -- transposed once, here, not per call / per kernel
        buf = jnp.zeros((in_pad, out_pad), jnp.float32).at[:wt.shape[0], :wt.shape[1]].set(wt)
        return buf.astype(mm_dtype)

    def prep_b(b, out_pad):
        b = jnp.asarray(b, jnp.float32).reshape(1, -1)  # accepts [out] or [1, out]
        return jnp.zeros((1, out_pad), jnp.float32).at[:, :b.shape[1]].set(b)

    weights = {
        "wp": prep_w(wp, in_p, out_p), "bp": prep_b(params["bp"], out_p),
        "w1": prep_w(w1, out_p, hid_p), "b1": prep_b(params["b1"], hid_p),
        "w2": prep_w(w2, hid_p, hid_p), "b2": prep_b(params["b2"], hid_p),
        "wh": prep_w(wh, hid_p, val_p), "bh": prep_b(params["bh"], val_p),
    }
    dims = (int(num_inputs), int(num_outputs), int(num_hidden))
    return weights, dims


# ---------------------------------------------------------------------------
# Generation-aware defaults
# ---------------------------------------------------------------------------
_HW_CACHE = None


def _hw_config():
    """Returns (vmem_budget_bytes, target_batch_tile, min_grid_steps)."""
    global _HW_CACHE
    if _HW_CACHE is None:
        try:
            vmem = int(pltpu.get_tpu_info().vmem_capacity_bytes)
        except Exception:
            vmem = 64 * _MIB  # conservative: assume v7x-class (64 MiB per TensorCore)
        if vmem >= 100 * _MIB:          # v5e / v6e: 128 MiB VMEM, single TensorCore
            _HW_CACHE = (96 * _MIB, 1024, 1)
        else:                           # v7x: 64 MiB per TC, 2 TCs -> want >=2 grid steps
            _HW_CACHE = (48 * _MIB, 512, 2)
    return _HW_CACHE


# ---------------------------------------------------------------------------
# Forward
# ---------------------------------------------------------------------------
@functools.partial(jax.jit, static_argnames=("dims", "tb", "single_buffer"))
def _forward(x, weights, *, dims, tb, single_buffer):
    num_inputs, num_outputs, num_hidden = dims
    B = x.shape[0]
    assert x.shape[1] == num_inputs

    wp = weights["wp"]
    in_p, out_p = wp.shape
    hid_p = weights["w2"].shape[0]
    val_p = weights["wh"].shape[1]
    mm_dtype = wp.dtype
    mm_bytes = jnp.dtype(mm_dtype).itemsize
    x_bytes = jnp.dtype(x.dtype).itemsize

    vmem_budget, target_tb, min_steps = _hw_config()
    w_elems = in_p * out_p + out_p * hid_p + hid_p * hid_p + hid_p * val_p
    b_elems = out_p + 2 * hid_p + val_p
    w_bufs = 1 if single_buffer else 2

    def vmem_est(tb_):
        x_buf = 2 * tb_ * in_p * max(mm_bytes, x_bytes)            # x (double-buffered)
        out_buf = 2 * tb_ * (out_p + _LANE) * 4                    # action + value blocks
        w_buf = w_bufs * (mm_bytes * w_elems + 4 * b_elems)        # resident weights/biases
        inter = 4 * tb_ * (out_p + 2 * hid_p + val_p) \
            + mm_bytes * tb_ * (out_p + 2 * hid_p)                 # f32 temporaries + casts
        return x_buf + out_buf + w_buf + inter

    # Batch-tile selection: minimize padding, respect the VMEM budget, and keep >=2 grid
    # steps on multi-TensorCore parts so "parallel" semantics can split the work.
    if tb is None:
        n_steps = max(1, _cdiv(B, target_tb))
        if B >= 2 * _SUBLANE:
            n_steps = max(n_steps, min_steps)
        tb_sel = _round_up(_cdiv(B, n_steps), _SUBLANE)
        while tb_sel > _SUBLANE and vmem_est(tb_sel) > vmem_budget:
            n_steps += 1
            tb_sel = _round_up(_cdiv(B, n_steps), _SUBLANE)
        tb = tb_sel
    else:
        tb = max(_SUBLANE, _round_up(int(tb), _SUBLANE))

    Bp = _round_up(B, tb)
    grid = (Bp // tb,)

    # Input: skip the pad/copy entirely when already aligned (the kernel casts x itself).
    if Bp == B and in_p == num_inputs:
        xp = x
    else:
        xp = (jnp.zeros((Bp, in_p), mm_dtype)
              .at[:B, :num_inputs].set(x.astype(mm_dtype)))

    def batch_spec(width):
        return pl.BlockSpec((tb, width), lambda i: (i, 0))

    def resident_spec(shape):
        # Constant index_map: block stays resident across the whole batch grid.
        if single_buffer:
            # Single-buffer the resident weights (they never change) to halve their VMEM.
            return pl.BlockSpec(shape, lambda i: (0, 0), pipeline_mode=pl.Buffered(1))
        return pl.BlockSpec(shape, lambda i: (0, 0))

    in_specs = [
        batch_spec(xp.shape[1]),            # x
        resident_spec((in_p, out_p)),       # wp
        resident_spec((1, out_p)),          # bp
        resident_spec((out_p, hid_p)),      # w1
        resident_spec((1, hid_p)),          # b1
        resident_spec((hid_p, hid_p)),      # w2
        resident_spec((1, hid_p)),          # b2
        resident_spec((hid_p, val_p)),      # wh
        resident_spec((1, val_p)),          # bh
    ]
    out_specs = (batch_spec(out_p), batch_spec(1))

    flops = 2 * Bp * (in_p * out_p + out_p * hid_p + hid_p * hid_p + hid_p * val_p)
    bytes_accessed = (Bp * xp.shape[1] * jnp.dtype(xp.dtype).itemsize
                      + mm_bytes * w_elems + 4 * b_elems
                      + Bp * out_p * 4 + Bp * 4)
    cost = pl.CostEstimate(flops=flops, transcendentals=0, bytes_accessed=bytes_accessed)

    vmem_limit = int(max(min(vmem_est(tb) * 5 // 4, vmem_budget), 16 * _MIB))

    action_pad, value_pad = pl.pallas_call(
        _policy_value_kernel,
        out_shape=(jax.ShapeDtypeStruct((Bp, out_p), jnp.float32),
                   jax.ShapeDtypeStruct((Bp, 1), jnp.float32)),
        grid=grid,
        in_specs=in_specs,
        out_specs=out_specs,
        compiler_params=pltpu.CompilerParams(
            dimension_semantics=("parallel",),
            vmem_limit_bytes=vmem_limit),
        cost_estimate=cost,
    )(xp, weights["wp"], weights["bp"], weights["w1"], weights["b1"],
      weights["w2"], weights["b2"], weights["wh"], weights["bh"])

    # Skip the output slice copies when no padding was needed.
    action = action_pad if (Bp == B and out_p == num_outputs) else action_pad[:B, :num_outputs]
    value = value_pad if Bp == B else value_pad[:B]
    return action, value


# "untried" -> first successful call validated; "bad" -> this JAX build rejected
# pl.Buffered(1) single-buffering, permanently fall back to default double-buffering.
_single_buffer_state = "untried"


def policy_value_forward(x, prepared, *, tb=None):
    """Fused Policy_value forward. x: [B, num_inputs]. Returns (action [B, out], value [B, 1])."""
    weights, dims = prepared
    global _single_buffer_state
    if _single_buffer_state != "bad":
        try:
            out = _forward(x, weights, dims=dims, tb=tb, single_buffer=True)
            if _single_buffer_state == "untried":
                jax.block_until_ready(out)  # surface any lowering issue exactly once
                _single_buffer_state = "ok"
            return out
        except Exception:
            _single_buffer_state = "bad"
    return _forward(x, weights, dims=dims, tb=tb, single_buffer=False)


# ---------------------------------------------------------------------------
# Demo / self-test
# ---------------------------------------------------------------------------
def init_params(key, num_inputs, num_outputs, num_hidden):
    """Synthetic init mirroring the module's __init__ (PyTorch-style shapes, 1-D biases)."""
    ks = jax.random.split(key, 8)

    def default_linear(kw, kb, out_f, in_f):
        bound = 1.0 / (in_f ** 0.5)
        w = jax.random.uniform(kw, (out_f, in_f), jnp.float32, -bound, bound)
        b = jax.random.uniform(kb, (out_f,), jnp.float32, -bound, bound)
        return w, b

    wp = jax.random.uniform(ks[0], (num_outputs, num_inputs), jnp.float32, -0.1, 0.1)
    bp = jax.random.uniform(ks[1], (num_outputs,), jnp.float32, 0.0, 1.0)
    w1, b1 = default_linear(ks[2], ks[3], num_hidden, num_inputs)
    w2, b2 = default_linear(ks[4], ks[5], num_hidden, num_hidden)
    wh, bh = default_linear(ks[6], ks[7], 1, num_hidden)
    wh = wh * 0.1
    bh = bh * 0.0
    return {"wp": wp, "bp": bp, "w1": w1, "b1": b1,
            "w2": w2, "b2": b2, "wh": wh, "bh": bh}


def reference_forward(x, p):
    action = x @ p["wp"].T + p["bp"]
    h = jnp.maximum(action @ p["w1"].T + p["b1"], 0.0)
    h = jnp.maximum(h @ p["w2"].T + p["b2"], 0.0)
    value = h @ p["wh"].T + p["bh"]
    return action, value


if __name__ == "__main__":
    # Small shapes; the original module only runs when num_outputs == num_inputs.
    B, num_inputs, num_outputs, num_hidden = 8, 16, 16, 32

    key = jax.random.PRNGKey(0)
    k_x, k_p, k_x2 = jax.random.split(key, 3)
    x = jax.random.normal(k_x, (B, num_inputs), jnp.float32)
    params = init_params(k_p, num_inputs, num_outputs, num_hidden)

    ref_action, ref_value = reference_forward(x, params)

    # f32 matmul path: tight tolerance against the pure-JAX reference.
    prep_f32 = prepare_params(params, use_bf16=False)
    action, value = policy_value_forward(x, prep_f32)
    jax.block_until_ready((action, value))
    assert action.shape == (B, num_outputs)
    assert value.shape == (B, 1)
    assert jnp.allclose(action, ref_action, atol=1e-5, rtol=1e-5)
    assert jnp.allclose(value, ref_value, atol=1e-5, rtol=1e-5)

    # Default path: bf16 matmul inputs, f32 accumulation -> loose tolerance.
    prep_bf16 = prepare_params(params)
    action_bf, value_bf = policy_value_forward(x, prep_bf16)
    jax.block_until_ready((action_bf, value_bf))
    assert jnp.allclose(action_bf, ref_action, atol=5e-2, rtol=5e-2)
    assert jnp.allclose(value_bf, ref_value, atol=5e-2, rtol=5e-2)

    # Multi-step grid + batch/feature padding + output slicing path.
    B2 = 200
    x2 = jax.random.normal(k_x2, (B2, num_inputs), jnp.float32)
    ref_a2, ref_v2 = reference_forward(x2, params)
    a2, v2 = policy_value_forward(x2, prep_f32, tb=64)   # Bp=256, grid=(4,)
    jax.block_until_ready((a2, v2))
    assert a2.shape == (B2, num_outputs) and v2.shape == (B2, 1)
    assert jnp.allclose(a2, ref_a2, atol=1e-5, rtol=1e-5)
    assert jnp.allclose(v2, ref_v2, atol=1e-5, rtol=1e-5)

    print("KERNEL_OK")
</pallas_src>

<mosaic_0001>
module attributes {stable_mosaic.version = 11 : i64} {
  func.func @_policy_value_kernel(%arg0: i32, %arg1: memref<8x128xf32, #tpu.memory_space<vmem>>, %arg2: memref<128x128xf32, #tpu.memory_space<vmem>>, %arg3: memref<1x128xf32, #tpu.memory_space<vmem>>, %arg4: memref<128x128xf32, #tpu.memory_space<vmem>>, %arg5: memref<1x128xf32, #tpu.memory_space<vmem>>, %arg6: memref<128x128xf32, #tpu.memory_space<vmem>>, %arg7: memref<1x128xf32, #tpu.memory_space<vmem>>, %arg8: memref<128x128xf32, #tpu.memory_space<vmem>>, %arg9: memref<1x128xf32, #tpu.memory_space<vmem>>, %arg10: memref<8x128xf32, #tpu.memory_space<vmem>>, %arg11: memref<8x1xf32, #tpu.memory_space<vmem>>) attributes {dimension_semantics = [#tpu.dimension_semantics<parallel>], iteration_bounds = array<i64: 1>, scalar_prefetch = 0 : i64, scratch_operands = 0 : i64, tpu.core_type = #tpu.core_type<tc>, window_params = [{transform_indices = @transform_0, window_bounds = array<i64: 8, 128>}, {pipeline_mode = #tpu.pipeline_mode<synchronous>, transform_indices = @transform_1, window_bounds = array<i64: 128, 128>}, {pipeline_mode = #tpu.pipeline_mode<synchronous>, transform_indices = @transform_2, window_bounds = array<i64: 1, 128>}, {pipeline_mode = #tpu.pipeline_mode<synchronous>, transform_indices = @transform_3, window_bounds = array<i64: 128, 128>}, {pipeline_mode = #tpu.pipeline_mode<synchronous>, transform_indices = @transform_4, window_bounds = array<i64: 1, 128>}, {pipeline_mode = #tpu.pipeline_mode<synchronous>, transform_indices = @transform_5, window_bounds = array<i64: 128, 128>}, {pipeline_mode = #tpu.pipeline_mode<synchronous>, transform_indices = @transform_6, window_bounds = array<i64: 1, 128>}, {pipeline_mode = #tpu.pipeline_mode<synchronous>, transform_indices = @transform_7, window_bounds = array<i64: 128, 128>}, {pipeline_mode = #tpu.pipeline_mode<synchronous>, transform_indices = @transform_8, window_bounds = array<i64: 1, 128>}, {transform_indices = @transform_9, window_bounds = array<i64: 8, 128>}, {transform_indices = @transform_10, window_bounds = array<i64: 8, 1>}]} {
    %c0 = arith.constant 0 : index
    %c0_0 = arith.constant 0 : index
    %0 = vector.load %arg1[%c0, %c0_0] : memref<8x128xf32, #tpu.memory_space<vmem>>, vector<8x128xf32>
    %c0_1 = arith.constant 0 : index
    %c0_2 = arith.constant 0 : index
    %1 = vector.load %arg2[%c0_1, %c0_2] : memref<128x128xf32, #tpu.memory_space<vmem>>, vector<128x128xf32>
    %cst = arith.constant dense<0.000000e+00> : vector<8x128xf32>
    %2 = tpu.matmul %0, %1, %cst {dimension_numbers = #tpu.dot_dimension_numbers<[1], [0], [0], [1], [0, 0, 1, 1], [], []>} : vector<8x128xf32>, vector<128x128xf32>, vector<8x128xf32> -> vector<8x128xf32>
    %c0_3 = arith.constant 0 : index
    %c0_4 = arith.constant 0 : index
    %3 = vector.load %arg3[%c0_3, %c0_4] : memref<1x128xf32, #tpu.memory_space<vmem>>, vector<1x128xf32>
    %4 = vector.broadcast %3 : vector<1x128xf32> to vector<8x128xf32>
    %5 = arith.addf %2, %4 : vector<8x128xf32>
    %c0_5 = arith.constant 0 : index
    %c0_6 = arith.constant 0 : index
    %6 = vector.load %arg10[%c0_5, %c0_6] : memref<8x128xf32, #tpu.memory_space<vmem>>, vector<8x128xf32>
    tpu.vector_store %arg10[%c0_5, %c0_6], %5 {strides = array<i32>} : memref<8x128xf32, #tpu.memory_space<vmem>>, vector<8x128xf32>,
    %c0_7 = arith.constant 0 : index
    %c0_8 = arith.constant 0 : index
    %7 = vector.load %arg4[%c0_7, %c0_8] : memref<128x128xf32, #tpu.memory_space<vmem>>, vector<128x128xf32>
    %cst_9 = arith.constant dense<0.000000e+00> : vector<8x128xf32>
    %8 = tpu.matmul %5, %7, %cst_9 {dimension_numbers = #tpu.dot_dimension_numbers<[1], [0], [0], [1], [0, 0, 1, 1], [], []>} : vector<8x128xf32>, vector<128x128xf32>, vector<8x128xf32> -> vector<8x128xf32>
    %c0_10 = arith.constant 0 : index
    %c0_11 = arith.constant 0 : index
    %9 = vector.load %arg5[%c0_10, %c0_11] : memref<1x128xf32, #tpu.memory_space<vmem>>, vector<1x128xf32>
    %10 = vector.broadcast %9 : vector<1x128xf32> to vector<8x128xf32>
    %11 = arith.addf %8, %10 : vector<8x128xf32>
    %cst_12 = arith.constant 0.000000e+00 : f32
    %12 = vector.broadcast %cst_12 : f32 to vector<8x128xf32>
    %13 = arith.maximumf %11, %12 : vector<8x128xf32>
    %c0_13 = arith.constant 0 : index
    %c0_14 = arith.constant 0 : index
    %14 = vector.load %arg6[%c0_13, %c0_14] : memref<128x128xf32, #tpu.memory_space<vmem>>, vector<128x128xf32>
    %cst_15 = arith.constant dense<0.000000e+00> : vector<8x128xf32>
    %15 = tpu.matmul %13, %14, %cst_15 {dimension_numbers = #tpu.dot_dimension_numbers<[1], [0], [0], [1], [0, 0, 1, 1], [], []>} : vector<8x128xf32>, vector<128x128xf32>, vector<8x128xf32> -> vector<8x128xf32>
    %c0_16 = arith.constant 0 : index
    %c0_17 = arith.constant 0 : index
    %16 = vector.load %arg7[%c0_16, %c0_17] : memref<1x128xf32, #tpu.memory_space<vmem>>, vector<1x128xf32>
    %17 = vector.broadcast %16 : vector<1x128xf32> to vector<8x128xf32>
    %18 = arith.addf %15, %17 : vector<8x128xf32>
    %cst_18 = arith.constant 0.000000e+00 : f32
    %19 = vector.broadcast %cst_18 : f32 to vector<8x128xf32>
    %20 = arith.maximumf %18, %19 : vector<8x128xf32>
    %c0_19 = arith.constant 0 : index
    %c0_20 = arith.constant 0 : index
    %21 = vector.load %arg8[%c0_19, %c0_20] : memref<128x128xf32, #tpu.memory_space<vmem>>, vector<128x128xf32>
    %cst_21 = arith.constant dense<0.000000e+00> : vector<8x128xf32>
    %22 = tpu.matmul %20, %21, %cst_21 {dimension_numbers = #tpu.dot_dimension_numbers<[1], [0], [0], [1], [0, 0, 1, 1], [], []>} : vector<8x128xf32>, vector<128x128xf32>, vector<8x128xf32> -> vector<8x128xf32>
    %c0_22 = arith.constant 0 : index
    %c0_23 = arith.constant 0 : index
    %23 = vector.load %arg9[%c0_22, %c0_23] : memref<1x128xf32, #tpu.memory_space<vmem>>, vector<1x128xf32>
    %24 = vector.broadcast %23 : vector<1x128xf32> to vector<8x128xf32>
    %25 = arith.addf %22, %24 : vector<8x128xf32>
    %26 = vector.extract_strided_slice %25 {offsets = [0, 0], sizes = [8, 1], strides = [1, 1]} : vector<8x128xf32> to vector<8x1xf32>
    %c0_24 = arith.constant 0 : index
    %c0_25 = arith.constant 0 : index
    %27 = vector.load %arg11[%c0_24, %c0_25] : memref<8x1xf32, #tpu.memory_space<vmem>>, vector<8x1xf32>
    tpu.vector_store %arg11[%c0_24, %c0_25], %26 {strides = array<i32>} : memref<8x1xf32, #tpu.memory_space<vmem>>, vector<8x1xf32>,
    return
  }
  func.func @transform_0(%arg0: i32) -> (i32, i32) {
    %c0_i32 = arith.constant 0 : i32
    %c0_i32_0 = arith.constant 0 : i32
    return %arg0, %c0_i32 : i32, i32
  }
  func.func @transform_1(%arg0: i32) -> (i32, i32) {
    %c0_i32 = arith.constant 0 : i32
    %c0_i32_0 = arith.constant 0 : i32
    %c0_i32_1 = arith.constant 0 : i32
    return %c0_i32, %c0_i32_0 : i32, i32
  }
  func.func @transform_2(%arg0: i32) -> (i32, i32) {
    %c0_i32 = arith.constant 0 : i32
    %c0_i32_0 = arith.constant 0 : i32
    %c0_i32_1 = arith.constant 0 : i32
    return %c0_i32, %c0_i32_0 : i32, i32
  }
  func.func @transform_3(%arg0: i32) -> (i32, i32) {
    %c0_i32 = arith.constant 0 : i32
    %c0_i32_0 = arith.constant 0 : i32
    %c0_i32_1 = arith.constant 0 : i32
    return %c0_i32, %c0_i32_0 : i32, i32
  }
  func.func @transform_4(%arg0: i32) -> (i32, i32) {
    %c0_i32 = arith.constant 0 : i32
    %c0_i32_0 = arith.constant 0 : i32
    %c0_i32_1 = arith.constant 0 : i32
    return %c0_i32, %c0_i32_0 : i32, i32
  }
  func.func @transform_5(%arg0: i32) -> (i32, i32) {
    %c0_i32 = arith.constant 0 : i32
    %c0_i32_0 = arith.constant 0 : i32
    %c0_i32_1 = arith.constant 0 : i32
    return %c0_i32, %c0_i32_0 : i32, i32
  }
  func.func @transform_6(%arg0: i32) -> (i32, i32) {
    %c0_i32 = arith.constant 0 : i32
    %c0_i32_0 = arith.constant 0 : i32
    %c0_i32_1 = arith.constant 0 : i32
    return %c0_i32, %c0_i32_0 : i32, i32
  }
  func.func @transform_7(%arg0: i32) -> (i32, i32) {
    %c0_i32 = arith.constant 0 : i32
    %c0_i32_0 = arith.constant 0 : i32
    %c0_i32_1 = arith.constant 0 : i32
    return %c0_i32, %c0_i32_0 : i32, i32
  }
  func.func @transform_8(%arg0: i32) -> (i32, i32) {
    %c0_i32 = arith.constant 0 : i32
    %c0_i32_0 = arith.constant 0 : i32
    %c0_i32_1 = arith.constant 0 : i32
    return %c0_i32, %c0_i32_0 : i32, i32
  }
  func.func @transform_9(%arg0: i32) -> (i32, i32) {
    %c0_i32 = arith.constant 0 : i32
    %c0_i32_0 = arith.constant 0 : i32
    return %arg0, %c0_i32 : i32, i32
  }
  func.func @transform_10(%arg0: i32) -> (i32, i32) {
    %c0_i32 = arith.constant 0 : i32
    %c0_i32_0 = arith.constant 0 : i32
    return %arg0, %c0_i32 : i32, i32
  }
}

module attributes {stable_mosaic.version = 11 : i64} {
  func.func @_policy_value_kernel(%arg0: i32, %arg1: memref<8x128xf32, #tpu.memory_space<vmem>>, %arg2: memref<128x128xf32, #tpu.memory_space<vmem>>, %arg3: memref<1x128xf32, #tpu.memory_space<vmem>>, %arg4: memref<128x128xf32, #tpu.memory_space<vmem>>, %arg5: memref<1x128xf32, #tpu.memory_space<vmem>>, %arg6: memref<128x128xf32, #tpu.memory_space<vmem>>, %arg7: memref<1x128xf32, #tpu.memory_space<vmem>>, %arg8: memref<128x128xf32, #tpu.memory_space<vmem>>, %arg9: memref<1x128xf32, #tpu.memory_space<vmem>>, %arg10: memref<8x128xf32, #tpu.memory_space<vmem>>, %arg11: memref<8x1xf32, #tpu.memory_space<vmem>>) attributes {dimension_semantics = [#tpu.dimension_semantics<parallel>], iteration_bounds = array<i64: 1>, scalar_prefetch = 0 : i64, scratch_operands = 0 : i64, tpu.core_type = #tpu.core_type<tc>, window_params = [{transform_indices = @transform_0, window_bounds = array<i64: 8, 128>}, {pipeline_mode = #tpu.pipeline_mode<synchronous>, transform_indices = @transform_1, window_bounds = array<i64: 128, 128>}, {pipeline_mode = #tpu.pipeline_mode<synchronous>, transform_indices = @transform_2, window_bounds = array<i64: 1, 128>}, {pipeline_mode = #tpu.pipeline_mode<synchronous>, transform_indices = @transform_3, window_bounds = array<i64: 128, 128>}, {pipeline_mode = #tpu.pipeline_mode<synchronous>, transform_indices = @transform_4, window_bounds = array<i64: 1, 128>}, {pipeline_mode = #tpu.pipeline_mode<synchronous>, transform_indices = @transform_5, window_bounds = array<i64: 128, 128>}, {pipeline_mode = #tpu.pipeline_mode<synchronous>, transform_indices = @transform_6, window_bounds = array<i64: 1, 128>}, {pipeline_mode = #tpu.pipeline_mode<synchronous>, transform_indices = @transform_7, window_bounds = array<i64: 128, 128>}, {pipeline_mode = #tpu.pipeline_mode<synchronous>, transform_indices = @transform_8, window_bounds = array<i64: 1, 128>}, {transform_indices = @transform_9, window_bounds = array<i64: 8, 128>}, {transform_indices = @transform_10, window_bounds = array<i64: 8, 1>}]} {
    %c0 = arith.constant 0 : index
    %c0_0 = arith.constant 0 : index
    %0 = vector.load %arg1[%c0, %c0_0] : memref<8x128xf32, #tpu.memory_space<vmem>>, vector<8x128xf32>
    %c0_1 = arith.constant 0 : index
    %c0_2 = arith.constant 0 : index
    %1 = vector.load %arg2[%c0_1, %c0_2] : memref<128x128xf32, #tpu.memory_space<vmem>>, vector<128x128xf32>
    %cst = arith.constant dense<0.000000e+00> : vector<8x128xf32>
    %2 = tpu.matmul %0, %1, %cst {dimension_numbers = #tpu.dot_dimension_numbers<[1], [0], [0], [1], [0, 0, 1, 1], [], []>} : vector<8x128xf32>, vector<128x128xf32>, vector<8x128xf32> -> vector<8x128xf32>
    %c0_3 = arith.constant 0 : index
    %c0_4 = arith.constant 0 : index
    %3 = vector.load %arg3[%c0_3, %c0_4] : memref<1x128xf32, #tpu.memory_space<vmem>>, vector<1x128xf32>
    %4 = vector.broadcast %3 : vector<1x128xf32> to vector<8x128xf32>
    %5 = arith.addf %2, %4 : vector<8x128xf32>
    %c0_5 = arith.constant 0 : index
    %c0_6 = arith.constant 0 : index
    %6 = vector.load %arg10[%c0_5, %c0_6] : memref<8x128xf32, #tpu.memory_space<vmem>>, vector<8x128xf32>
    tpu.vector_store %arg10[%c0_5, %c0_6], %5 {strides = array<i32>} : memref<8x128xf32, #tpu.memory_space<vmem>>, vector<8x128xf32>,
    %c0_7 = arith.constant 0 : index
    %c0_8 = arith.constant 0 : index
    %7 = vector.load %arg4[%c0_7, %c0_8] : memref<128x128xf32, #tpu.memory_space<vmem>>, vector<128x128xf32>
    %cst_9 = arith.constant dense<0.000000e+00> : vector<8x128xf32>
    %8 = tpu.matmul %5, %7, %cst_9 {dimension_numbers = #tpu.dot_dimension_numbers<[1], [0], [0], [1], [0, 0, 1, 1], [], []>} : vector<8x128xf32>, vector<128x128xf32>, vector<8x128xf32> -> vector<8x128xf32>
    %c0_10 = arith.constant 0 : index
    %c0_11 = arith.constant 0 : index
    %9 = vector.load %arg5[%c0_10, %c0_11] : memref<1x128xf32, #tpu.memory_space<vmem>>, vector<1x128xf32>
    %10 = vector.broadcast %9 : vector<1x128xf32> to vector<8x128xf32>
    %11 = arith.addf %8, %10 : vector<8x128xf32>
    %cst_12 = arith.constant 0.000000e+00 : f32
    %12 = vector.broadcast %cst_12 : f32 to vector<8x128xf32>
    %13 = arith.maximumf %11, %12 : vector<8x128xf32>
    %c0_13 = arith.constant 0 : index
    %c0_14 = arith.constant 0 : index
    %14 = vector.load %arg6[%c0_13, %c0_14] : memref<128x128xf32, #tpu.memory_space<vmem>>, vector<128x128xf32>
    %cst_15 = arith.constant dense<0.000000e+00> : vector<8x128xf32>
    %15 = tpu.matmul %13, %14, %cst_15 {dimension_numbers = #tpu.dot_dimension_numbers<[1], [0], [0], [1], [0, 0, 1, 1], [], []>} : vector<8x128xf32>, vector<128x128xf32>, vector<8x128xf32> -> vector<8x128xf32>
    %c0_16 = arith.constant 0 : index
    %c0_17 = arith.constant 0 : index
    %16 = vector.load %arg7[%c0_16, %c0_17] : memref<1x128xf32, #tpu.memory_space<vmem>>, vector<1x128xf32>
    %17 = vector.broadcast %16 : vector<1x128xf32> to vector<8x128xf32>
    %18 = arith.addf %15, %17 : vector<8x128xf32>
    %cst_18 = arith.constant 0.000000e+00 : f32
    %19 = vector.broadcast %cst_18 : f32 to vector<8x128xf32>
    %20 = arith.maximumf %18, %19 : vector<8x128xf32>
    %c0_19 = arith.constant 0 : index
    %c0_20 = arith.constant 0 : index
    %21 = vector.load %arg8[%c0_19, %c0_20] : memref<128x128xf32, #tpu.memory_space<vmem>>, vector<128x128xf32>
    %cst_21 = arith.constant dense<0.000000e+00> : vector<8x128xf32>
    %22 = tpu.matmul %20, %21, %cst_21 {dimension_numbers = #tpu.dot_dimension_numbers<[1], [0], [0], [1], [0, 0, 1, 1], [], []>} : vector<8x128xf32>, vector<128x128xf32>, vector<8x128xf32> -> vector<8x128xf32>
    %c0_22 = arith.constant 0 : index
    %c0_23 = arith.constant 0 : index
    %23 = vector.load %arg9[%c0_22, %c0_23] : memref<1x128xf32, #tpu.memory_space<vmem>>, vector<1x128xf32>
    %24 = vector.broadcast %23 : vector<1x128xf32> to vector<8x128xf32>
    %25 = arith.addf %22, %24 : vector<8x128xf32>
    %26 = vector.extract_strided_slice %25 {offsets = [0, 0], sizes = [8, 1], strides = [1, 1]} : vector<8x128xf32> to vector<8x1xf32>
    %c0_24 = arith.constant 0 : index
    %c0_25 = arith.constant 0 : index
    %27 = vector.load %arg11[%c0_24, %c0_25] : memref<8x1xf32, #tpu.memory_space<vmem>>, vector<8x1xf32>
    tpu.vector_store %arg11[%c0_24, %c0_25], %26 {strides = array<i32>} : memref<8x1xf32, #tpu.memory_space<vmem>>, vector<8x1xf32>,
    return
  }
  func.func @transform_0(%arg0: i32) -> (i32, i32) {
    %c0_i32 = arith.constant 0 : i32
    %c0_i32_0 = arith.constant 0 : i32
    return %arg0, %c0_i32 : i32, i32
  }
  func.func @transform_1(%arg0: i32) -> (i32, i32) {
    %c0_i32 = arith.constant 0 : i32
    %c0_i32_0 = arith.constant 0 : i32
    %c0_i32_1 = arith.constant 0 : i32
    return %c0_i32, %c0_i32_0 : i32, i32
  }
  func.func @transform_2(%arg0: i32) -> (i32, i32) {
    %c0_i32 = arith.constant 0 : i32
    %c0_i32_0 = arith.constant 0 : i32
    %c0_i32_1 = arith.constant 0 : i32
    return %c0_i32, %c0_i32_0 : i32, i32
  }
  func.func @transform_3(%arg0: i32) -> (i32, i32) {
    %c0_i32 = arith.constant 0 : i32
    %c0_i32_0 = arith.constant 0 : i32
    %c0_i32_1 = arith.constant 0 : i32
    return %c0_i32, %c0_i32_0 : i32, i32
  }
  func.func @transform_4(%arg0: i32) -> (i32, i32) {
    %c0_i32 = arith.constant 0 : i32
    %c0_i32_0 = arith.constant 0 : i32
    %c0_i32_1 = arith.constant 0 : i32
    return %c0_i32, %c0_i32_0 : i32, i32
  }
  func.func @transform_5(%arg0: i32) -> (i32, i32) {
    %c0_i32 = arith.constant 0 : i32
    %c0_i32_0 = arith.constant 0 : i32
    %c0_i32_1 = arith.constant 0 : i32
    return %c0_i32, %c0_i32_0 : i32, i32
  }
  func.func @transform_6(%arg0: i32) -> (i32, i32) {
    %c0_i32 = arith.constant 0 : i32
    %c0_i32_0 = arith.constant 0 : i32
    %c0_i32_1 = arith.constant 0 : i32
    return %c0_i32, %c0_i32_0 : i32, i32
  }
  func.func @transform_7(%arg0: i32) -> (i32, i32) {
    %c0_i32 = arith.constant 0 : i32
    %c0_i32_0 = arith.constant 0 : i32
    %c0_i32_1 = arith.constant 0 : i32
    return %c0_i32, %c0_i32_0 : i32, i32
  }
  func.func @transform_8(%arg0: i32) -> (i32, i32) {
    %c0_i32 = arith.constant 0 : i32
    %c0_i32_0 = arith.constant 0 : i32
    %c0_i32_1 = arith.constant 0 : i32
    return %c0_i32, %c0_i32_0 : i32, i32
  }
  func.func @transform_9(%arg0: i32) -> (i32, i32) {
    %c0_i32 = arith.constant 0 : i32
    %c0_i32_0 = arith.constant 0 : i32
    return %arg0, %c0_i32 : i32, i32
  }
  func.func @transform_10(%arg0: i32) -> (i32, i32) {
    %c0_i32 = arith.constant 0 : i32
    %c0_i32_0 = arith.constant 0 : i32
    return %arg0, %c0_i32 : i32, i32
  }
}

</mosaic_0001>

<llo_original>
// kernel: _forward.1
$region0: #{_forward.1}
  #allocation0 [shape = 'u32[]', space=smem, size = 0x4, offset = 0x4, fixed_abs, tag = 'smem constant byte address 0x4 - core index']
  #allocation1 [shape = 'u32[144,128]{1,0:T(1,128)}', space=vmem, size = 0x12000, scoped, tag = 'internal scratch']
  %s0 = inlined_call_operand.vmem [shape: f32[8,128], index: 0, kind: input, shape index: {}]
  %s1 = inlined_call_operand.hbm [shape: f32[128,128], index: 1, kind: input, shape index: {}]
  %s2 = inlined_call_operand.vmem [shape: f32[1,128], index: 2, kind: input, shape index: {}]
  %s3 = inlined_call_operand.hbm [shape: f32[128,128], index: 3, kind: input, shape index: {}]
  %s4 = inlined_call_operand.vmem [shape: f32[1,128], index: 4, kind: input, shape index: {}]
  %s5 = inlined_call_operand.hbm [shape: f32[128,128], index: 5, kind: input, shape index: {}]
  %s6 = inlined_call_operand.vmem [shape: f32[1,128], index: 6, kind: input, shape index: {}]
  %s7 = inlined_call_operand.hbm [shape: f32[128,128], index: 7, kind: input, shape index: {}]
  %s8 = inlined_call_operand.vmem [shape: f32[1,128], index: 8, kind: input, shape index: {}]
  %s9 = inlined_call_operand.hbm [shape: f32[8,128], index: 9, kind: output, shape index: {0}]
  %s10 = inlined_call_operand.vmem [shape: f32[8,1], index: 10, kind: output, shape index: {1}]
  %11 = xla_tuple %s9, %s10
  %s12 = sld [smem:[#allocation0]]
  $region70: #{_forward.1} parent=0
    _
  %s14 = ssub.s32 1, %s12
  %s15 = scalar_select 0, %s14, %s12
  $region1: #{_forward.1} parent=0
    #allocation2 [shape = 'u8[65536]{0}', space=vmem, size = 0x10000, scoped, tag = 'input window, operand 1, single buffered']
    #allocation3 [shape = 's32[1]{0}', space=sflag, size = 0x4, scoped, tag = 'scoped memory for _forward.1']
    #allocation4 [shape = 's32[1]{0}', space=sflag, size = 0x4, scoped, tag = 'scoped memory for _forward.1']
    #allocation5 [shape = 'u8[65536]{0}', space=vmem, size = 0x10000, scoped, tag = 'input window, operand 3, single buffered']
    #allocation6 [shape = 's32[1]{0}', space=sflag, size = 0x4, scoped, tag = 'scoped memory for _forward.1']
    #allocation7 [shape = 'u8[65536]{0}', space=vmem, size = 0x10000, scoped, tag = 'input window, operand 5, single buffered']
    #allocation8 [shape = 'u8[65536]{0}', space=vmem, size = 0x10000, scoped, tag = 'input window, operand 7, single buffered']
    #allocation9 [shape = 's32[1]{0}', space=sflag, size = 0x4, scoped, tag = 'scoped memory for _forward.1']
    #allocation10 [shape = 'u8[4096]{0}', space=vmem, size = 0x1000, scoped, tag = 'output window, operand 0, single buffered']
    %16 = vsyncpa [#allocation3], 0
    %17 = vsyncpa [#allocation6], 0
    %18 = vsyncpa [#allocation9], 0
    %19 = vsyncpa [#allocation4], 0
    // Predicated region
    $region2: #{_forward.1} parent=1 // pred_check
      _
    $region3: #{_forward.1} parent=1 // pred_check_branch
      %21 = sbr.rel (0) target = $region5
    $region4: #{_forward.1} parent=1 // pred_region
      _
    $region5: #{_forward.1} parent=1 // pred_fallthru
      _
    // Predicated region
    $region6: #{_forward.1} parent=1 // pred_check
      _
    $region7: #{_forward.1} parent=1 // pred_check_branch
      %23 = sbr.rel (0) target = $region9
    $region8: #{_forward.1} parent=1 // pred_region
      %s25 = ssub.s32 2048, 2048
      %26 = vsyncadd [#allocation3], %s25
      %s27 = sshll.u32 [#allocation2], 4
      %s28 = int_to_ptr.vmem [resolvable:$true] %s27
      %33 = dma.hbm_to_vmem [thread:$0]  %s1, 2048, %s28, [#allocation3], 128, 128, 8
    $region9: #{_forward.1} parent=1 // pred_fallthru
      _
    // Predicated region
    $region10: #{_forward.1} parent=1 // pred_check
      _
    $region11: #{_forward.1} parent=1 // pred_check_branch
      %35 = sbr.rel (0) target = $region13
    $region12: #{_forward.1} parent=1 // pred_region
      _
    $region13: #{_forward.1} parent=1 // pred_fallthru
      _
    // Predicated region
    $region14: #{_forward.1} parent=1 // pred_check
      _
    $region15: #{_forward.1} parent=1 // pred_check_branch
      %37 = sbr.rel (0) target = $region17
    $region16: #{_forward.1} parent=1 // pred_region
      %s39 = ssub.s32 2048, 2048
      %40 = vsyncadd [#allocation6], %s39
      %s41 = sshll.u32 [#allocation5], 4
      %s42 = int_to_ptr.vmem [resolvable:$true] %s41
      %47 = dma.hbm_to_vmem [thread:$0]  %s3, 2048, %s42, [#allocation6], 128, 128, 8
    $region17: #{_forward.1} parent=1 // pred_fallthru
      _
    // Predicated region
    $region18: #{_forward.1} parent=1 // pred_check
      _
    $region19: #{_forward.1} parent=1 // pred_check_branch
      %49 = sbr.rel (0) target = $region21
    $region20: #{_forward.1} parent=1 // pred_region
      _
    $region21: #{_forward.1} parent=1 // pred_fallthru
      _
    // Predicated region
    $region22: #{_forward.1} parent=1 // pred_check
      _
    $region23: #{_forward.1} parent=1 // pred_check_branch
      %51 = sbr.rel (0) target = $region25
    $region24: #{_forward.1} parent=1 // pred_region
      %s53 = ssub.s32 2048, 2048
      %54 = vsyncadd [#allocation6], %s53
      %s55 = sshll.u32 [#allocation7], 4
      %s56 = int_to_ptr.vmem [resolvable:$true] %s55
      %61 = dma.hbm_to_vmem [thread:$0]  %s5, 2048, %s56, [#allocation6], 128, 128, 8
    $region25: #{_forward.1} parent=1 // pred_fallthru
      _
    // Predicated region
    $region26: #{_forward.1} parent=1 // pred_check
      _
    $region27: #{_forward.1} parent=1 // pred_check_branch
      %63 = sbr.rel (0) target = $region29
    $region28: #{_forward.1} parent=1 // pred_region
      _
    $region29: #{_forward.1} parent=1 // pred_fallthru
      _
    // Predicated region
    $region30: #{_forward.1} parent=1 // pred_check
      _
    $region31: #{_forward.1} parent=1 // pred_check_branch
      %65 = sbr.rel (0) target = $region33
    $region32: #{_forward.1} parent=1 // pred_region
      %s67 = ssub.s32 2048, 2048
      %68 = vsyncadd [#allocation9], %s67
      %s69 = sshll.u32 [#allocation8], 4
      %s70 = int_to_ptr.vmem [resolvable:$true] %s69
      %75 = dma.hbm_to_vmem [thread:$0]  %s7, 2048, %s70, [#allocation9], 128, 128, 8
    $region33: #{_forward.1} parent=1 // pred_fallthru
      _
    // Predicated region
    $region34: #{_forward.1} parent=1 // pred_check
      _
    $region35: #{_forward.1} parent=1 // pred_check_branch
      %77 = sbr.rel (0) target = $region37
    $region36: #{_forward.1} parent=1 // pred_region
      _
    $region37: #{_forward.1} parent=1 // pred_fallthru
      _
    // Predicated region
    $region38: #{_forward.1} parent=1 // pred_check
      _
    $region39: #{_forward.1} parent=1 // pred_check_branch
      %79 = sbr.rel (0) target = $region41
    $region40: #{_forward.1} parent=1 // pred_region
      %80 = dma.done [#allocation3], 2048
    $region41: #{_forward.1} parent=1 // pred_fallthru
      _
    // Predicated region
    $region42: #{_forward.1} parent=1 // pred_check
      _
    $region43: #{_forward.1} parent=1 // pred_check_branch
      %82 = sbr.rel (0) target = $region45
    $region44: #{_forward.1} parent=1 // pred_region
      %83 = dma.done [#allocation6], 2048
    $region45: #{_forward.1} parent=1 // pred_fallthru
      _
    // Predicated region
    $region46: #{_forward.1} parent=1 // pred_check
      _
    $region47: #{_forward.1} parent=1 // pred_check_branch
      %85 = sbr.rel (0) target = $region49
    $region48: #{_forward.1} parent=1 // pred_region
      %86 = dma.done [#allocation6], 2048
    $region49: #{_forward.1} parent=1 // pred_fallthru
      _
    // Predicated region
    $region50: #{_forward.1} parent=1 // pred_check
      _
    $region51: #{_forward.1} parent=1 // pred_check_branch
      %88 = sbr.rel (0) target = $region53
    $region52: #{_forward.1} parent=1 // pred_region
      %89 = dma.done [#allocation9], 2048
    $region53: #{_forward.1} parent=1 // pred_fallthru
      _
    %v90 = vld [vmem:[%s0] sm:$0xff]
    %v91 = vld [vmem:[#allocation2] sm:$0xff]
    %v92 = vld [vmem:[#allocation2 + $0x8] sm:$0xff]
    %v93 = vld [vmem:[#allocation2 + $0x10] sm:$0xff]
    %v94 = vld [vmem:[#allocation2 + $0x18] sm:$0xff]
    %v95 = vld [vmem:[#allocation2 + $0x20] sm:$0xff]
    %v96 = vld [vmem:[#allocation2 + $0x28] sm:$0xff]
    %v97 = vld [vmem:[#allocation2 + $0x30] sm:$0xff]
    %v98 = vld [vmem:[#allocation2 + $0x38] sm:$0xff]
    %v99 = vld [vmem:[#allocation2 + $0x40] sm:$0xff]
    %v100 = vld [vmem:[#allocation2 + $0x48] sm:$0xff]
    %v101 = vld [vmem:[#allocation2 + $0x50] sm:$0xff]
    %v102 = vld [vmem:[#allocation2 + $0x58] sm:$0xff]
    %v103 = vld [vmem:[#allocation2 + $0x60] sm:$0xff]
    %v104 = vld [vmem:[#allocation2 + $0x68] sm:$0xff]
    %v105 = vld [vmem:[#allocation2 + $0x70] sm:$0xff]
    %v106 = vld [vmem:[#allocation2 + $0x78] sm:$0xff]
    %v107 = vld [vmem:[%s2] sm:$0x1]
    %v109 = vlaneseq
    %v110 = vshrl.u32 %v109, 7
    %v111 = vsub.s32 0, %v110
    %v112 = vrot.slane %v107, %v111
    %114 = vmatprep.subr.mxu0 0.0
    %115 = vmatpush1.msra.mxu0 %v91
    %116 = vmatprep.subr.mxu0 0.0
    %117 = vmatpush1.msra.mxu0 %v92
    %118 = vmatprep.subr.mxu0 0.0
    %119 = vmatpush1.msra.mxu0 %v93
    %120 = vmatprep.subr.mxu0 0.0
    %121 = vmatpush1.msra.mxu0 %v94
    %122 = vmatprep.subr.mxu0 0.0
    %123 = vmatpush1.msra.mxu0 %v95
    %124 = vmatprep.subr.mxu0 0.0
    %125 = vmatpush1.msra.mxu0 %v96
    %126 = vmatprep.subr.mxu0 0.0
    %127 = vmatpush1.msra.mxu0 %v97
    %128 = vmatprep.subr.mxu0 0.0
    %129 = vmatpush1.msra.mxu0 %v98
    %130 = vmatprep.subr.mxu0 0.0
    %131 = vmatpush1.msra.mxu0 %v99
    %132 = vmatprep.subr.mxu0 0.0
    %133 = vmatpush1.msra.mxu0 %v100
    %134 = vmatprep.subr.mxu0 0.0
    %135 = vmatpush1.msra.mxu0 %v101
    %136 = vmatprep.subr.mxu0 0.0
    %137 = vmatpush1.msra.mxu0 %v102
    %138 = vmatprep.subr.mxu0 0.0
    %139 = vmatpush1.msra.mxu0 %v103
    %140 = vmatprep.subr.mxu0 0.0
    %141 = vmatpush1.msra.mxu0 %v104
    %142 = vmatprep.subr.mxu0 0.0
    %143 = vmatpush1.msra.mxu0 %v105
    %144 = vmatprep.subr.mxu0 0.0
    %145 = vmatpush1.msra.mxu0 %v106
    %146 = vmatprep.subr.mxu0 0.0
    %147 = vmatpush1.msra.mxu0 0.0
    %148 = vmatprep.subr.mxu0 0.0
    %149 = vmatpush1.msra.mxu0 0.0
    %150 = vmatprep.subr.mxu0 0.0
    %151 = vmatpush1.msra.mxu0 0.0
    %152 = vmatprep.subr.mxu0 0.0
    %153 = vmatpush1.msra.mxu0 0.0
    %154 = vmatprep.subr.mxu0 0.0
    %155 = vmatpush1.msra.mxu0 0.0
    %156 = vmatprep.subr.mxu0 0.0
    %157 = vmatpush1.msra.mxu0 0.0
    %158 = vmatprep.subr.mxu0 0.0
    %159 = vmatpush1.msra.mxu0 0.0
    %160 = vmatprep.subr.mxu0 0.0
    %161 = vmatpush1.msra.mxu0 0.0
    %162 = vmatprep.subr.mxu0 0.0
    %163 = vmatpush1.msra.mxu0 0.0
    %164 = vmatprep.subr.mxu0 0.0
    %165 = vmatpush1.msra.mxu0 0.0
    %166 = vmatprep.subr.mxu0 0.0
    %167 = vmatpush1.msra.mxu0 0.0
    %168 = vmatprep.subr.mxu0 0.0
    %169 = vmatpush1.msra.mxu0 0.0
    %170 = vmatprep.subr.mxu0 0.0
    %171 = vmatpush1.msra.mxu0 0.0
    %172 = vmatprep.subr.mxu0 0.0
    %173 = vmatpush1.msra.mxu0 0.0
    %174 = vmatprep.subr.mxu0 0.0
    %175 = vmatpush1.msra.mxu0 0.0
    %176 = vmatprep.subr.mxu0 0.0
    %177 = vmatpush1.msra.mxu0 0.0
    %178 = vmatprep.mubr.f32.mxu0 0.0
    %179 = vmatmul.mubr.f32.gmra.mrb[0].mxu0 %v90
    %v180 = vpop.f32.mrb[0].mxu0
    %v181 = vadd.f32 %v112, %v180
    %v182 = vpop.f32.mrb[0].mxu0
    %183 = vdwg.mxu0
    %184 = vst [vmem:[#allocation10] sm:$0xff] %v181
    %v185 = vld [vmem:[#allocation5] sm:$0xff]
    %v186 = vld [vmem:[#allocation5 + $0x8] sm:$0xff]
    %v187 = vld [vmem:[#allocation5 + $0x10] sm:$0xff]
    %v188 = vld [vmem:[#allocation5 + $0x18] sm:$0xff]
    %v189 = vld [vmem:[#allocation5 + $0x20] sm:$0xff]
    %v190 = vld [vmem:[#allocation5 + $0x28] sm:$0xff]
    %v191 = vld [vmem:[#allocation5 + $0x30] sm:$0xff]
    %v192 = vld [vmem:[#allocation5 + $0x38] sm:$0xff]
    %v193 = vld [vmem:[#allocation5 + $0x40] sm:$0xff]
    %v194 = vld [vmem:[#allocation5 + $0x48] sm:$0xff]
    %v195 = vld [vmem:[#allocation5 + $0x50] sm:$0xff]
    %v196 = vld [vmem:[#allocation5 + $0x58] sm:$0xff]
    %v197 = vld [vmem:[#allocation5 + $0x60] sm:$0xff]
    %v198 = vld [vmem:[#allocation5 + $0x68] sm:$0xff]
    %v199 = vld [vmem:[#allocation5 + $0x70] sm:$0xff]
    %v200 = vld [vmem:[#allocation5 + $0x78] sm:$0xff]
    %v201 = vld [vmem:[%s4] sm:$0x1]
    %v203 = vlaneseq
    %v204 = vshrl.u32 %v203, 7
    %v205 = vsub.s32 0, %v204
    %v206 = vrot.slane %v201, %v205
    %208 = vmatprep.subr.mxu0 0.0
    %209 = vmatpush1.msra.mxu0 %v185
    %210 = vmatprep.subr.mxu0 0.0
    %211 = vmatpush1.msra.mxu0 %v186
    %212 = vmatprep.subr.mxu0 0.0
    %213 = vmatpush1.msra.mxu0 %v187
    %214 = vmatprep.subr.mxu0 0.0
    %215 = vmatpush1.msra.mxu0 %v188
    %216 = vmatprep.subr.mxu0 0.0
    %217 = vmatpush1.msra.mxu0 %v189
    %218 = vmatprep.subr.mxu0 0.0
    %219 = vmatpush1.msra.mxu0 %v190
    %220 = vmatprep.subr.mxu0 0.0
    %221 = vmatpush1.msra.mxu0 %v191
    %222 = vmatprep.subr.mxu0 0.0
    %223 = vmatpush1.msra.mxu0 %v192
    %224 = vmatprep.subr.mxu0 0.0
    %225 = vmatpush1.msra.mxu0 %v193
    %226 = vmatprep.subr.mxu0 0.0
    %227 = vmatpush1.msra.mxu0 %v194
    %228 = vmatprep.subr.mxu0 0.0
    %229 = vmatpush1.msra.mxu0 %v195
    %230 = vmatprep.subr.mxu0 0.0
    %231 = vmatpush1.msra.mxu0 %v196
    %232 = vmatprep.subr.mxu0 0.0
    %233 = vmatpush1.msra.mxu0 %v197
    %234 = vmatprep.subr.mxu0 0.0
    %235 = vmatpush1.msra.mxu0 %v198
    %236 = vmatprep.subr.mxu0 0.0
    %237 = vmatpush1.msra.mxu0 %v199
    %238 = vmatprep.subr.mxu0 0.0
    %239 = vmatpush1.msra.mxu0 %v200
    %240 = vmatprep.subr.mxu0 0.0
    %241 = vmatpush1.msra.mxu0 0.0
    %242 = vmatprep.subr.mxu0 0.0
    %243 = vmatpush1.msra.mxu0 0.0
    %244 = vmatprep.subr.mxu0 0.0
    %245 = vmatpush1.msra.mxu0 0.0
    %246 = vmatprep.subr.mxu0 0.0
    %247 = vmatpush1.msra.mxu0 0.0
    %248 = vmatprep.subr.mxu0 0.0
    %249 = vmatpush1.msra.mxu0 0.0
    %250 = vmatprep.subr.mxu0 0.0
    %251 = vmatpush1.msra.mxu0 0.0
    %252 = vmatprep.subr.mxu0 0.0
    %253 = vmatpush1.msra.mxu0 0.0
    %254 = vmatprep.subr.mxu0 0.0
    %255 = vmatpush1.msra.mxu0 0.0
    %256 = vmatprep.subr.mxu0 0.0
    %257 = vmatpush1.msra.mxu0 0.0
    %258 = vmatprep.subr.mxu0 0.0
    %259 = vmatpush1.msra.mxu0 0.0
    %260 = vmatprep.subr.mxu0 0.0
    %261 = vmatpush1.msra.mxu0 0.0
    %262 = vmatprep.subr.mxu0 0.0
    %263 = vmatpush1.msra.mxu0 0.0
    %264 = vmatprep.subr.mxu0 0.0
    %265 = vmatpush1.msra.mxu0 0.0
    %266 = vmatprep.subr.mxu0 0.0
    %267 = vmatpush1.msra.mxu0 0.0
    %268 = vmatprep.subr.mxu0 0.0
    %269 = vmatpush1.msra.mxu0 0.0
    %270 = vmatprep.subr.mxu0 0.0
    %271 = vmatpush1.msra.mxu0 0.0
    %272 = vmatprep.mubr.f32.mxu0 0.0
    %273 = vmatmul.mubr.f32.gmra.mrb[0].mxu0 %v181
    %v274 = vpop.f32.mrb[0].mxu0
    %v275 = vadd.f32 %v206, %v274
    %v276 = vpop.f32.mrb[0].mxu0
    %277 = vdwg.mxu0
    %v278 = vmax.f32 %v275, 0.0
    %v279 = vld [vmem:[#allocation7] sm:$0xff]
    %v280 = vld [vmem:[#allocation7 + $0x8] sm:$0xff]
    %v281 = vld [vmem:[#allocation7 + $0x10] sm:$0xff]
    %v282 = vld [vmem:[#allocation7 + $0x18] sm:$0xff]
    %v283 = vld [vmem:[#allocation7 + $0x20] sm:$0xff]
    %v284 = vld [vmem:[#allocation7 + $0x28] sm:$0xff]
    %v285 = vld [vmem:[#allocation7 + $0x30] sm:$0xff]
    %v286 = vld [vmem:[#allocation7 + $0x38] sm:$0xff]
    %v287 = vld [vmem:[#allocation7 + $0x40] sm:$0xff]
    %v288 = vld [vmem:[#allocation7 + $0x48] sm:$0xff]
    %v289 = vld [vmem:[#allocation7 + $0x50] sm:$0xff]
    %v290 = vld [vmem:[#allocation7 + $0x58] sm:$0xff]
    %v291 = vld [vmem:[#allocation7 + $0x60] sm:$0xff]
    %v292 = vld [vmem:[#allocation7 + $0x68] sm:$0xff]
    %v293 = vld [vmem:[#allocation7 + $0x70] sm:$0xff]
    %v294 = vld [vmem:[#allocation7 + $0x78] sm:$0xff]
    %v295 = vld [vmem:[%s6] sm:$0x1]
    %v297 = vlaneseq
    %v298 = vshrl.u32 %v297, 7
    %v299 = vsub.s32 0, %v298
    %v300 = vrot.slane %v295, %v299
    %302 = vmatprep.subr.mxu0 0.0
    %303 = vmatpush1.msra.mxu0 %v279
    %304 = vmatprep.subr.mxu0 0.0
    %305 = vmatpush1.msra.mxu0 %v280
    %306 = vmatprep.subr.mxu0 0.0
    %307 = vmatpush1.msra.mxu0 %v281
    %308 = vmatprep.subr.mxu0 0.0
    %309 = vmatpush1.msra.mxu0 %v282
    %310 = vmatprep.subr.mxu0 0.0
    %311 = vmatpush1.msra.mxu0 %v283
    %312 = vmatprep.subr.mxu0 0.0
    %313 = vmatpush1.msra.mxu0 %v284
    %314 = vmatprep.subr.mxu0 0.0
    %315 = vmatpush1.msra.mxu0 %v285
    %316 = vmatprep.subr.mxu0 0.0
    %317 = vmatpush1.msra.mxu0 %v286
    %318 = vmatprep.subr.mxu0 0.0
    %319 = vmatpush1.msra.mxu0 %v287
    %320 = vmatprep.subr.mxu0 0.0
    %321 = vmatpush1.msra.mxu0 %v288
    %322 = vmatprep.subr.mxu0 0.0
    %323 = vmatpush1.msra.mxu0 %v289
    %324 = vmatprep.subr.mxu0 0.0
    %325 = vmatpush1.msra.mxu0 %v290
    %326 = vmatprep.subr.mxu0 0.0
    %327 = vmatpush1.msra.mxu0 %v291
    %328 = vmatprep.subr.mxu0 0.0
    %329 = vmatpush1.msra.mxu0 %v292
    %330 = vmatprep.subr.mxu0 0.0
    %331 = vmatpush1.msra.mxu0 %v293
    %332 = vmatprep.subr.mxu0 0.0
    %333 = vmatpush1.msra.mxu0 %v294
    %334 = vmatprep.subr.mxu0 0.0
    %335 = vmatpush1.msra.mxu0 0.0
    %336 = vmatprep.subr.mxu0 0.0
    %337 = vmatpush1.msra.mxu0 0.0
    %338 = vmatprep.subr.mxu0 0.0
    %339 = vmatpush1.msra.mxu0 0.0
    %340 = vmatprep.subr.mxu0 0.0
    %341 = vmatpush1.msra.mxu0 0.0
    %342 = vmatprep.subr.mxu0 0.0
    %343 = vmatpush1.msra.mxu0 0.0
    %344 = vmatprep.subr.mxu0 0.0
    %345 = vmatpush1.msra.mxu0 0.0
    %346 = vmatprep.subr.mxu0 0.0
    %347 = vmatpush1.msra.mxu0 0.0
    %348 = vmatprep.subr.mxu0 0.0
    %349 = vmatpush1.msra.mxu0 0.0
    %350 = vmatprep.subr.mxu0 0.0
    %351 = vmatpush1.msra.mxu0 0.0
    %352 = vmatprep.subr.mxu0 0.0
    %353 = vmatpush1.msra.mxu0 0.0
    %354 = vmatprep.subr.mxu0 0.0
    %355 = vmatpush1.msra.mxu0 0.0
    %356 = vmatprep.subr.mxu0 0.0
    %357 = vmatpush1.msra.mxu0 0.0
    %358 = vmatprep.subr.mxu0 0.0
    %359 = vmatpush1.msra.mxu0 0.0
    %360 = vmatprep.subr.mxu0 0.0
    %361 = vmatpush1.msra.mxu0 0.0
    %362 = vmatprep.subr.mxu0 0.0
    %363 = vmatpush1.msra.mxu0 0.0
    %364 = vmatprep.subr.mxu0 0.0
    %365 = vmatpush1.msra.mxu0 0.0
    %366 = vmatprep.mubr.f32.mxu0 0.0
    %367 = vmatmul.mubr.f32.gmra.mrb[0].mxu0 %v278
    %v368 = vpop.f32.mrb[0].mxu0
    %v369 = vadd.f32 %v300, %v368
    %v370 = vpop.f32.mrb[0].mxu0
    %371 = vdwg.mxu0
    %v372 = vmax.f32 %v369, 0.0
    %v373 = vld [vmem:[#allocation8] sm:$0xff]
    %v374 = vld [vmem:[#allocation8 + $0x8] sm:$0xff]
    %v375 = vld [vmem:[#allocation8 + $0x10] sm:$0xff]
    %v376 = vld [vmem:[#allocation8 + $0x18] sm:$0xff]
    %v377 = vld [vmem:[#allocation8 + $0x20] sm:$0xff]
    %v378 = vld [vmem:[#allocation8 + $0x28] sm:$0xff]
    %v379 = vld [vmem:[#allocation8 + $0x30] sm:$0xff]
    %v380 = vld [vmem:[#allocation8 + $0x38] sm:$0xff]
    %v381 = vld [vmem:[#allocation8 + $0x40] sm:$0xff]
    %v382 = vld [vmem:[#allocation8 + $0x48] sm:$0xff]
    %v383 = vld [vmem:[#allocation8 + $0x50] sm:$0xff]
    %v384 = vld [vmem:[#allocation8 + $0x58] sm:$0xff]
    %v385 = vld [vmem:[#allocation8 + $0x60] sm:$0xff]
    %v386 = vld [vmem:[#allocation8 + $0x68] sm:$0xff]
    %v387 = vld [vmem:[#allocation8 + $0x70] sm:$0xff]
    %v388 = vld [vmem:[#allocation8 + $0x78] sm:$0xff]
    %v389 = vld [vmem:[%s8] sm:$0x1]
    %v391 = vlaneseq
    %v392 = vshrl.u32 %v391, 7
    %v393 = vsub.s32 0, %v392
    %v394 = vrot.slane %v389, %v393
    %396 = vmatprep.subr.mxu0 0.0
    %397 = vmatpush1.msra.mxu0 %v373
    %398 = vmatprep.subr.mxu0 0.0
    %399 = vmatpush1.msra.mxu0 %v374
    %400 = vmatprep.subr.mxu0 0.0
    %401 = vmatpush1.msra.mxu0 %v375
    %402 = vmatprep.subr.mxu0 0.0
    %403 = vmatpush1.msra.mxu0 %v376
    %404 = vmatprep.subr.mxu0 0.0
    %405 = vmatpush1.msra.mxu0 %v377
    %406 = vmatprep.subr.mxu0 0.0
    %407 = vmatpush1.msra.mxu0 %v378
    %408 = vmatprep.subr.mxu0 0.0
    %409 = vmatpush1.msra.mxu0 %v379
    %410 = vmatprep.subr.mxu0 0.0
    %411 = vmatpush1.msra.mxu0 %v380
    %412 = vmatprep.subr.mxu0 0.0
    %413 = vmatpush1.msra.mxu0 %v381
    %414 = vmatprep.subr.mxu0 0.0
    %415 = vmatpush1.msra.mxu0 %v382
    %416 = vmatprep.subr.mxu0 0.0
    %417 = vmatpush1.msra.mxu0 %v383
    %418 = vmatprep.subr.mxu0 0.0
    %419 = vmatpush1.msra.mxu0 %v384
    %420 = vmatprep.subr.mxu0 0.0
    %421 = vmatpush1.msra.mxu0 %v385
    %422 = vmatprep.subr.mxu0 0.0
    %423 = vmatpush1.msra.mxu0 %v386
    %424 = vmatprep.subr.mxu0 0.0
    %425 = vmatpush1.msra.mxu0 %v387
    %426 = vmatprep.subr.mxu0 0.0
    %427 = vmatpush1.msra.mxu0 %v388
    %428 = vmatprep.subr.mxu0 0.0
    %429 = vmatpush1.msra.mxu0 0.0
    %430 = vmatprep.subr.mxu0 0.0
    %431 = vmatpush1.msra.mxu0 0.0
    %432 = vmatprep.subr.mxu0 0.0
    %433 = vmatpush1.msra.mxu0 0.0
    %434 = vmatprep.subr.mxu0 0.0
    %435 = vmatpush1.msra.mxu0 0.0
    %436 = vmatprep.subr.mxu0 0.0
    %437 = vmatpush1.msra.mxu0 0.0
    %438 = vmatprep.subr.mxu0 0.0
    %439 = vmatpush1.msra.mxu0 0.0
    %440 = vmatprep.subr.mxu0 0.0
    %441 = vmatpush1.msra.mxu0 0.0
    %442 = vmatprep.subr.mxu0 0.0
    %443 = vmatpush1.msra.mxu0 0.0
    %444 = vmatprep.subr.mxu0 0.0
    %445 = vmatpush1.msra.mxu0 0.0
    %446 = vmatprep.subr.mxu0 0.0
    %447 = vmatpush1.msra.mxu0 0.0
    %448 = vmatprep.subr.mxu0 0.0
    %449 = vmatpush1.msra.mxu0 0.0
    %450 = vmatprep.subr.mxu0 0.0
    %451 = vmatpush1.msra.mxu0 0.0
    %452 = vmatprep.subr.mxu0 0.0
    %453 = vmatpush1.msra.mxu0 0.0
    %454 = vmatprep.subr.mxu0 0.0
    %455 = vmatpush1.msra.mxu0 0.0
    %456 = vmatprep.subr.mxu0 0.0
    %457 = vmatpush1.msra.mxu0 0.0
    %458 = vmatprep.subr.mxu0 0.0
    %459 = vmatpush1.msra.mxu0 0.0
    %460 = vmatprep.mubr.f32.mxu0 0.0
    %461 = vmatmul.mubr.f32.gmra.mrb[0].mxu0 %v372
    %v462 = vpop.f32.mrb[0].mxu0
    %v463 = vadd.f32 %v394, %v462
    %v464 = vpop.f32.mrb[0].mxu0
    %465 = vdwg.mxu0
    %vm466 = vcmask 7168
    %467 = vst.msk [vmem:[%s10] sm:$0xff] %vm466, %v463
    // Predicated region
    $region54: #{_forward.1} parent=1 // pred_check
      _
    $region55: #{_forward.1} parent=1 // pred_check_branch
      %469 = sbr.rel (0) target = $region57
    $region56: #{_forward.1} parent=1 // pred_region
      %s471 = ssub.s32 128, 128
      %472 = vsyncadd [#allocation4], %s471
      %s474 = sshll.u32 [#allocation10], 4
      %s475 = int_to_ptr.vmem [resolvable:$true] %s474
      %477 = dma.vmem_to_hbm [thread:$0]  %s475, 128, %s9, [#allocation4]
    $region57: #{_forward.1} parent=1 // pred_fallthru
      _
    // Predicated region
    $region58: #{_forward.1} parent=1 // pred_check
      _
    $region59: #{_forward.1} parent=1 // pred_check_branch
      %479 = sbr.rel (0) target = $region61
    $region60: #{_forward.1} parent=1 // pred_region
      _
    $region61: #{_forward.1} parent=1 // pred_fallthru
      _
    // Predicated region
    $region62: #{_forward.1} parent=1 // pred_check
      _
    $region63: #{_forward.1} parent=1 // pred_check_branch
      %481 = sbr.rel (0) target = $region65
    $region64: #{_forward.1} parent=1 // pred_region
      %482 = dma.done [#allocation4], 128
    $region65: #{_forward.1} parent=1 // pred_fallthru
      _
    // Predicated region
    $region66: #{_forward.1} parent=1 // pred_check
      _
    $region67: #{_forward.1} parent=1 // pred_check_branch
      %484 = sbr.rel (0) target = $region69
    $region68: #{_forward.1} parent=1 // pred_region
      _
    $region69: #{_forward.1} parent=1 // pred_fallthru
      _
    %485 = vsyncpa [#allocation3], 1
    %486 = vsyncpa [#allocation6], 1
    %487 = vsyncpa [#allocation9], 1
    %488 = vsyncpa [#allocation4], 1

// kernel: _forward.1
$region0: #{_forward.1}
  #allocation0 [shape = 'u32[]', space=smem, size = 0x4, offset = 0x4, fixed_abs, tag = 'smem constant byte address 0x4 - core index']
  #allocation1 [shape = 'u32[144,128]{1,0:T(1,128)}', space=vmem, size = 0x12000, scoped, tag = 'internal scratch']
  %s0 = inlined_call_operand.vmem [shape: f32[8,128], index: 0, kind: input, shape index: {}]
  %s1 = inlined_call_operand.hbm [shape: f32[128,128], index: 1, kind: input, shape index: {}]
  %s2 = inlined_call_operand.vmem [shape: f32[1,128], index: 2, kind: input, shape index: {}]
  %s3 = inlined_call_operand.hbm [shape: f32[128,128], index: 3, kind: input, shape index: {}]
  %s4 = inlined_call_operand.vmem [shape: f32[1,128], index: 4, kind: input, shape index: {}]
  %s5 = inlined_call_operand.hbm [shape: f32[128,128], index: 5, kind: input, shape index: {}]
  %s6 = inlined_call_operand.vmem [shape: f32[1,128], index: 6, kind: input, shape index: {}]
  %s7 = inlined_call_operand.hbm [shape: f32[128,128], index: 7, kind: input, shape index: {}]
  %s8 = inlined_call_operand.vmem [shape: f32[1,128], index: 8, kind: input, shape index: {}]
  %s9 = inlined_call_operand.hbm [shape: f32[8,128], index: 9, kind: output, shape index: {0}]
  %s10 = inlined_call_operand.vmem [shape: f32[8,1], index: 10, kind: output, shape index: {1}]
  %11 = xla_tuple %s9, %s10
  %s12 = sld [smem:[#allocation0]]
  $region70: #{_forward.1} parent=0
    _
  %s14 = ssub.s32 1, %s12
  %s15 = scalar_select 0, %s14, %s12
  $region1: #{_forward.1} parent=0
    #allocation2 [shape = 'u8[65536]{0}', space=vmem, size = 0x10000, scoped, tag = 'input window, operand 1, single buffered']
    #allocation3 [shape = 's32[1]{0}', space=sflag, size = 0x4, scoped, tag = 'scoped memory for _forward.1']
    #allocation4 [shape = 's32[1]{0}', space=sflag, size = 0x4, scoped, tag = 'scoped memory for _forward.1']
    #allocation5 [shape = 'u8[65536]{0}', space=vmem, size = 0x10000, scoped, tag = 'input window, operand 3, single buffered']
    #allocation6 [shape = 's32[1]{0}', space=sflag, size = 0x4, scoped, tag = 'scoped memory for _forward.1']
    #allocation7 [shape = 'u8[65536]{0}', space=vmem, size = 0x10000, scoped, tag = 'input window, operand 5, single buffered']
    #allocation8 [shape = 'u8[65536]{0}', space=vmem, size = 0x10000, scoped, tag = 'input window, operand 7, single buffered']
    #allocation9 [shape = 's32[1]{0}', space=sflag, size = 0x4, scoped, tag = 'scoped memory for _forward.1']
    #allocation10 [shape = 'u8[4096]{0}', space=vmem, size = 0x1000, scoped, tag = 'output window, operand 0, single buffered']
    %16 = vsyncpa [#allocation3], 0
    %17 = vsyncpa [#allocation6], 0
    %18 = vsyncpa [#allocation9], 0
    %19 = vsyncpa [#allocation4], 0
    // Predicated region
    $region2: #{_forward.1} parent=1 // pred_check
      _
    $region3: #{_forward.1} parent=1 // pred_check_branch
      %21 = sbr.rel (0) target = $region5
    $region4: #{_forward.1} parent=1 // pred_region
      _
    $region5: #{_forward.1} parent=1 // pred_fallthru
      _
    // Predicated region
    $region6: #{_forward.1} parent=1 // pred_check
      _
    $region7: #{_forward.1} parent=1 // pred_check_branch
      %23 = sbr.rel (0) target = $region9
    $region8: #{_forward.1} parent=1 // pred_region
      %s25 = ssub.s32 2048, 2048
      %26 = vsyncadd [#allocation3], %s25
      %s27 = sshll.u32 [#allocation2], 4
      %s28 = int_to_ptr.vmem [resolvable:$true] %s27
      %33 = dma.hbm_to_vmem [thread:$0]  %s1, 2048, %s28, [#allocation3], 128, 128, 8
    $region9: #{_forward.1} parent=1 // pred_fallthru
      _
    // Predicated region
    $region10: #{_forward.1} parent=1 // pred_check
      _
    $region11: #{_forward.1} parent=1 // pred_check_branch
      %35 = sbr.rel (0) target = $region13
    $region12: #{_forward.1} parent=1 // pred_region
      _
    $region13: #{_forward.1} parent=1 // pred_fallthru
      _
    // Predicated region
    $region14: #{_forward.1} parent=1 // pred_check
      _
    $region15: #{_forward.1} parent=1 // pred_check_branch
      %37 = sbr.rel (0) target = $region17
    $region16: #{_forward.1} parent=1 // pred_region
      %s39 = ssub.s32 2048, 2048
      %40 = vsyncadd [#allocation6], %s39
      %s41 = sshll.u32 [#allocation5], 4
      %s42 = int_to_ptr.vmem [resolvable:$true] %s41
      %47 = dma.hbm_to_vmem [thread:$0]  %s3, 2048, %s42, [#allocation6], 128, 128, 8
    $region17: #{_forward.1} parent=1 // pred_fallthru
      _
    // Predicated region
    $region18: #{_forward.1} parent=1 // pred_check
      _
    $region19: #{_forward.1} parent=1 // pred_check_branch
      %49 = sbr.rel (0) target = $region21
    $region20: #{_forward.1} parent=1 // pred_region
      _
    $region21: #{_forward.1} parent=1 // pred_fallthru
      _
    // Predicated region
    $region22: #{_forward.1} parent=1 // pred_check
      _
    $region23: #{_forward.1} parent=1 // pred_check_branch
      %51 = sbr.rel (0) target = $region25
    $region24: #{_forward.1} parent=1 // pred_region
      %s53 = ssub.s32 2048, 2048
      %54 = vsyncadd [#allocation6], %s53
      %s55 = sshll.u32 [#allocation7], 4
      %s56 = int_to_ptr.vmem [resolvable:$true] %s55
      %61 = dma.hbm_to_vmem [thread:$0]  %s5, 2048, %s56, [#allocation6], 128, 128, 8
    $region25: #{_forward.1} parent=1 // pred_fallthru
      _
    // Predicated region
    $region26: #{_forward.1} parent=1 // pred_check
      _
    $region27: #{_forward.1} parent=1 // pred_check_branch
      %63 = sbr.rel (0) target = $region29
    $region28: #{_forward.1} parent=1 // pred_region
      _
    $region29: #{_forward.1} parent=1 // pred_fallthru
      _
    // Predicated region
    $region30: #{_forward.1} parent=1 // pred_check
      _
    $region31: #{_forward.1} parent=1 // pred_check_branch
      %65 = sbr.rel (0) target = $region33
    $region32: #{_forward.1} parent=1 // pred_region
      %s67 = ssub.s32 2048, 2048
      %68 = vsyncadd [#allocation9], %s67
      %s69 = sshll.u32 [#allocation8], 4
      %s70 = int_to_ptr.vmem [resolvable:$true] %s69
      %75 = dma.hbm_to_vmem [thread:$0]  %s7, 2048, %s70, [#allocation9], 128, 128, 8
    $region33: #{_forward.1} parent=1 // pred_fallthru
      _
    // Predicated region
    $region34: #{_forward.1} parent=1 // pred_check
      _
    $region35: #{_forward.1} parent=1 // pred_check_branch
      %77 = sbr.rel (0) target = $region37
    $region36: #{_forward.1} parent=1 // pred_region
      _
    $region37: #{_forward.1} parent=1 // pred_fallthru
      _
    // Predicated region
    $region38: #{_forward.1} parent=1 // pred_check
      _
    $region39: #{_forward.1} parent=1 // pred_check_branch
      %79 = sbr.rel (0) target = $region41
    $region40: #{_forward.1} parent=1 // pred_region
      %80 = dma.done [#allocation3], 2048
    $region41: #{_forward.1} parent=1 // pred_fallthru
      _
    // Predicated region
    $region42: #{_forward.1} parent=1 // pred_check
      _
    $region43: #{_forward.1} parent=1 // pred_check_branch
      %82 = sbr.rel (0) target = $region45
    $region44: #{_forward.1} parent=1 // pred_region
      %83 = dma.done [#allocation6], 2048
    $region45: #{_forward.1} parent=1 // pred_fallthru
      _
    // Predicated region
    $region46: #{_forward.1} parent=1 // pred_check
      _
    $region47: #{_forward.1} parent=1 // pred_check_branch
      %85 = sbr.rel (0) target = $region49
    $region48: #{_forward.1} parent=1 // pred_region
      %86 = dma.done [#allocation6], 2048
    $region49: #{_forward.1} parent=1 // pred_fallthru
      _
    // Predicated region
    $region50: #{_forward.1} parent=1 // pred_check
      _
    $region51: #{_forward.1} parent=1 // pred_check_branch
      %88 = sbr.rel (0) target = $region53
    $region52: #{_forward.1} parent=1 // pred_region
      %89 = dma.done [#allocation9], 2048
    $region53: #{_forward.1} parent=1 // pred_fallthru
      _
    %v90 = vld [vmem:[%s0] sm:$0xff]
    %v91 = vld [vmem:[#allocation2] sm:$0xff]
    %v92 = vld [vmem:[#allocation2 + $0x8] sm:$0xff]
    %v93 = vld [vmem:[#allocation2 + $0x10] sm:$0xff]
    %v94 = vld [vmem:[#allocation2 + $0x18] sm:$0xff]
    %v95 = vld [vmem:[#allocation2 + $0x20] sm:$0xff]
    %v96 = vld [vmem:[#allocation2 + $0x28] sm:$0xff]
    %v97 = vld [vmem:[#allocation2 + $0x30] sm:$0xff]
    %v98 = vld [vmem:[#allocation2 + $0x38] sm:$0xff]
    %v99 = vld [vmem:[#allocation2 + $0x40] sm:$0xff]
    %v100 = vld [vmem:[#allocation2 + $0x48] sm:$0xff]
    %v101 = vld [vmem:[#allocation2 + $0x50] sm:$0xff]
    %v102 = vld [vmem:[#allocation2 + $0x58] sm:$0xff]
    %v103 = vld [vmem:[#allocation2 + $0x60] sm:$0xff]
    %v104 = vld [vmem:[#allocation2 + $0x68] sm:$0xff]
    %v105 = vld [vmem:[#allocation2 + $0x70] sm:$0xff]
    %v106 = vld [vmem:[#allocation2 + $0x78] sm:$0xff]
    %v107 = vld [vmem:[%s2] sm:$0x1]
    %v109 = vlaneseq
    %v110 = vshrl.u32 %v109, 7
    %v111 = vsub.s32 0, %v110
    %v112 = vrot.slane %v107, %v111
    %114 = vmatprep.subr.mxu0 0.0
    %115 = vmatpush1.msra.mxu0 %v91
    %116 = vmatprep.subr.mxu0 0.0
    %117 = vmatpush1.msra.mxu0 %v92
    %118 = vmatprep.subr.mxu0 0.0
    %119 = vmatpush1.msra.mxu0 %v93
    %120 = vmatprep.subr.mxu0 0.0
    %121 = vmatpush1.msra.mxu0 %v94
    %122 = vmatprep.subr.mxu0 0.0
    %123 = vmatpush1.msra.mxu0 %v95
    %124 = vmatprep.subr.mxu0 0.0
    %125 = vmatpush1.msra.mxu0 %v96
    %126 = vmatprep.subr.mxu0 0.0
    %127 = vmatpush1.msra.mxu0 %v97
    %128 = vmatprep.subr.mxu0 0.0
    %129 = vmatpush1.msra.mxu0 %v98
    %130 = vmatprep.subr.mxu0 0.0
    %131 = vmatpush1.msra.mxu0 %v99
    %132 = vmatprep.subr.mxu0 0.0
    %133 = vmatpush1.msra.mxu0 %v100
    %134 = vmatprep.subr.mxu0 0.0
    %135 = vmatpush1.msra.mxu0 %v101
    %136 = vmatprep.subr.mxu0 0.0
    %137 = vmatpush1.msra.mxu0 %v102
    %138 = vmatprep.subr.mxu0 0.0
    %139 = vmatpush1.msra.mxu0 %v103
    %140 = vmatprep.subr.mxu0 0.0
    %141 = vmatpush1.msra.mxu0 %v104
    %142 = vmatprep.subr.mxu0 0.0
    %143 = vmatpush1.msra.mxu0 %v105
    %144 = vmatprep.subr.mxu0 0.0
    %145 = vmatpush1.msra.mxu0 %v106
    %146 = vmatprep.subr.mxu0 0.0
    %147 = vmatpush1.msra.mxu0 0.0
    %148 = vmatprep.subr.mxu0 0.0
    %149 = vmatpush1.msra.mxu0 0.0
    %150 = vmatprep.subr.mxu0 0.0
    %151 = vmatpush1.msra.mxu0 0.0
    %152 = vmatprep.subr.mxu0 0.0
    %153 = vmatpush1.msra.mxu0 0.0
    %154 = vmatprep.subr.mxu0 0.0
    %155 = vmatpush1.msra.mxu0 0.0
    %156 = vmatprep.subr.mxu0 0.0
    %157 = vmatpush1.msra.mxu0 0.0
    %158 = vmatprep.subr.mxu0 0.0
    %159 = vmatpush1.msra.mxu0 0.0
    %160 = vmatprep.subr.mxu0 0.0
    %161 = vmatpush1.msra.mxu0 0.0
    %162 = vmatprep.subr.mxu0 0.0
    %163 = vmatpush1.msra.mxu0 0.0
    %164 = vmatprep.subr.mxu0 0.0
    %165 = vmatpush1.msra.mxu0 0.0
    %166 = vmatprep.subr.mxu0 0.0
    %167 = vmatpush1.msra.mxu0 0.0
    %168 = vmatprep.subr.mxu0 0.0
    %169 = vmatpush1.msra.mxu0 0.0
    %170 = vmatprep.subr.mxu0 0.0
    %171 = vmatpush1.msra.mxu0 0.0
    %172 = vmatprep.subr.mxu0 0.0
    %173 = vmatpush1.msra.mxu0 0.0
    %174 = vmatprep.subr.mxu0 0.0
    %175 = vmatpush1.msra.mxu0 0.0
    %176 = vmatprep.subr.mxu0 0.0
    %177 = vmatpush1.msra.mxu0 0.0
    %178 = vmatprep.mubr.f32.mxu0 0.0
    %179 = vmatmul.mubr.f32.gmra.mrb[0].mxu0 %v90
    %v180 = vpop.f32.mrb[0].mxu0
    %v181 = vadd.f32 %v112, %v180
    %v182 = vpop.f32.mrb[0].mxu0
    %183 = vdwg.mxu0
    %184 = vst [vmem:[#allocation10] sm:$0xff] %v181
    %v185 = vld [vmem:[#allocation5] sm:$0xff]
    %v186 = vld [vmem:[#allocation5 + $0x8] sm:$0xff]
    %v187 = vld [vmem:[#allocation5 + $0x10] sm:$0xff]
    %v188 = vld [vmem:[#allocation5 + $0x18] sm:$0xff]
    %v189 = vld [vmem:[#allocation5 + $0x20] sm:$0xff]
    %v190 = vld [vmem:[#allocation5 + $0x28] sm:$0xff]
    %v191 = vld [vmem:[#allocation5 + $0x30] sm:$0xff]
    %v192 = vld [vmem:[#allocation5 + $0x38] sm:$0xff]
    %v193 = vld [vmem:[#allocation5 + $0x40] sm:$0xff]
    %v194 = vld [vmem:[#allocation5 + $0x48] sm:$0xff]
    %v195 = vld [vmem:[#allocation5 + $0x50] sm:$0xff]
    %v196 = vld [vmem:[#allocation5 + $0x58] sm:$0xff]
    %v197 = vld [vmem:[#allocation5 + $0x60] sm:$0xff]
    %v198 = vld [vmem:[#allocation5 + $0x68] sm:$0xff]
    %v199 = vld [vmem:[#allocation5 + $0x70] sm:$0xff]
    %v200 = vld [vmem:[#allocation5 + $0x78] sm:$0xff]
    %v201 = vld [vmem:[%s4] sm:$0x1]
    %v203 = vlaneseq
    %v204 = vshrl.u32 %v203, 7
    %v205 = vsub.s32 0, %v204
    %v206 = vrot.slane %v201, %v205
    %208 = vmatprep.subr.mxu0 0.0
    %209 = vmatpush1.msra.mxu0 %v185
    %210 = vmatprep.subr.mxu0 0.0
    %211 = vmatpush1.msra.mxu0 %v186
    %212 = vmatprep.subr.mxu0 0.0
    %213 = vmatpush1.msra.mxu0 %v187
    %214 = vmatprep.subr.mxu0 0.0
    %215 = vmatpush1.msra.mxu0 %v188
    %216 = vmatprep.subr.mxu0 0.0
    %217 = vmatpush1.msra.mxu0 %v189
    %218 = vmatprep.subr.mxu0 0.0
    %219 = vmatpush1.msra.mxu0 %v190
    %220 = vmatprep.subr.mxu0 0.0
    %221 = vmatpush1.msra.mxu0 %v191
    %222 = vmatprep.subr.mxu0 0.0
    %223 = vmatpush1.msra.mxu0 %v192
    %224 = vmatprep.subr.mxu0 0.0
    %225 = vmatpush1.msra.mxu0 %v193
    %226 = vmatprep.subr.mxu0 0.0
    %227 = vmatpush1.msra.mxu0 %v194
    %228 = vmatprep.subr.mxu0 0.0
    %229 = vmatpush1.msra.mxu0 %v195
    %230 = vmatprep.subr.mxu0 0.0
    %231 = vmatpush1.msra.mxu0 %v196
    %232 = vmatprep.subr.mxu0 0.0
    %233 = vmatpush1.msra.mxu0 %v197
    %234 = vmatprep.subr.mxu0 0.0
    %235 = vmatpush1.msra.mxu0 %v198
    %236 = vmatprep.subr.mxu0 0.0
    %237 = vmatpush1.msra.mxu0 %v199
    %238 = vmatprep.subr.mxu0 0.0
    %239 = vmatpush1.msra.mxu0 %v200
    %240 = vmatprep.subr.mxu0 0.0
    %241 = vmatpush1.msra.mxu0 0.0
    %242 = vmatprep.subr.mxu0 0.0
    %243 = vmatpush1.msra.mxu0 0.0
    %244 = vmatprep.subr.mxu0 0.0
    %245 = vmatpush1.msra.mxu0 0.0
    %246 = vmatprep.subr.mxu0 0.0
    %247 = vmatpush1.msra.mxu0 0.0
    %248 = vmatprep.subr.mxu0 0.0
    %249 = vmatpush1.msra.mxu0 0.0
    %250 = vmatprep.subr.mxu0 0.0
    %251 = vmatpush1.msra.mxu0 0.0
    %252 = vmatprep.subr.mxu0 0.0
    %253 = vmatpush1.msra.mxu0 0.0
    %254 = vmatprep.subr.mxu0 0.0
    %255 = vmatpush1.msra.mxu0 0.0
    %256 = vmatprep.subr.mxu0 0.0
    %257 = vmatpush1.msra.mxu0 0.0
    %258 = vmatprep.subr.mxu0 0.0
    %259 = vmatpush1.msra.mxu0 0.0
    %260 = vmatprep.subr.mxu0 0.0
    %261 = vmatpush1.msra.mxu0 0.0
    %262 = vmatprep.subr.mxu0 0.0
    %263 = vmatpush1.msra.mxu0 0.0
    %264 = vmatprep.subr.mxu0 0.0
    %265 = vmatpush1.msra.mxu0 0.0
    %266 = vmatprep.subr.mxu0 0.0
    %267 = vmatpush1.msra.mxu0 0.0
    %268 = vmatprep.subr.mxu0 0.0
    %269 = vmatpush1.msra.mxu0 0.0
    %270 = vmatprep.subr.mxu0 0.0
    %271 = vmatpush1.msra.mxu0 0.0
    %272 = vmatprep.mubr.f32.mxu0 0.0
    %273 = vmatmul.mubr.f32.gmra.mrb[0].mxu0 %v181
    %v274 = vpop.f32.mrb[0].mxu0
    %v275 = vadd.f32 %v206, %v274
    %v276 = vpop.f32.mrb[0].mxu0
    %277 = vdwg.mxu0
    %v278 = vmax.f32 %v275, 0.0
    %v279 = vld [vmem:[#allocation7] sm:$0xff]
    %v280 = vld [vmem:[#allocation7 + $0x8] sm:$0xff]
    %v281 = vld [vmem:[#allocation7 + $0x10] sm:$0xff]
    %v282 = vld [vmem:[#allocation7 + $0x18] sm:$0xff]
    %v283 = vld [vmem:[#allocation7 + $0x20] sm:$0xff]
    %v284 = vld [vmem:[#allocation7 + $0x28] sm:$0xff]
    %v285 = vld [vmem:[#allocation7 + $0x30] sm:$0xff]
    %v286 = vld [vmem:[#allocation7 + $0x38] sm:$0xff]
    %v287 = vld [vmem:[#allocation7 + $0x40] sm:$0xff]
    %v288 = vld [vmem:[#allocation7 + $0x48] sm:$0xff]
    %v289 = vld [vmem:[#allocation7 + $0x50] sm:$0xff]
    %v290 = vld [vmem:[#allocation7 + $0x58] sm:$0xff]
    %v291 = vld [vmem:[#allocation7 + $0x60] sm:$0xff]
    %v292 = vld [vmem:[#allocation7 + $0x68] sm:$0xff]
    %v293 = vld [vmem:[#allocation7 + $0x70] sm:$0xff]
    %v294 = vld [vmem:[#allocation7 + $0x78] sm:$0xff]
    %v295 = vld [vmem:[%s6] sm:$0x1]
    %v297 = vlaneseq
    %v298 = vshrl.u32 %v297, 7
    %v299 = vsub.s32 0, %v298
    %v300 = vrot.slane %v295, %v299
    %302 = vmatprep.subr.mxu0 0.0
    %303 = vmatpush1.msra.mxu0 %v279
    %304 = vmatprep.subr.mxu0 0.0
    %305 = vmatpush1.msra.mxu0 %v280
    %306 = vmatprep.subr.mxu0 0.0
    %307 = vmatpush1.msra.mxu0 %v281
    %308 = vmatprep.subr.mxu0 0.0
    %309 = vmatpush1.msra.mxu0 %v282
    %310 = vmatprep.subr.mxu0 0.0
    %311 = vmatpush1.msra.mxu0 %v283
    %312 = vmatprep.subr.mxu0 0.0
    %313 = vmatpush1.msra.mxu0 %v284
    %314 = vmatprep.subr.mxu0 0.0
    %315 = vmatpush1.msra.mxu0 %v285
    %316 = vmatprep.subr.mxu0 0.0
    %317 = vmatpush1.msra.mxu0 %v286
    %318 = vmatprep.subr.mxu0 0.0
    %319 = vmatpush1.msra.mxu0 %v287
    %320 = vmatprep.subr.mxu0 0.0
    %321 = vmatpush1.msra.mxu0 %v288
    %322 = vmatprep.subr.mxu0 0.0
    %323 = vmatpush1.msra.mxu0 %v289
    %324 = vmatprep.subr.mxu0 0.0
    %325 = vmatpush1.msra.mxu0 %v290
    %326 = vmatprep.subr.mxu0 0.0
    %327 = vmatpush1.msra.mxu0 %v291
    %328 = vmatprep.subr.mxu0 0.0
    %329 = vmatpush1.msra.mxu0 %v292
    %330 = vmatprep.subr.mxu0 0.0
    %331 = vmatpush1.msra.mxu0 %v293
    %332 = vmatprep.subr.mxu0 0.0
    %333 = vmatpush1.msra.mxu0 %v294
    %334 = vmatprep.subr.mxu0 0.0
    %335 = vmatpush1.msra.mxu0 0.0
    %336 = vmatprep.subr.mxu0 0.0
    %337 = vmatpush1.msra.mxu0 0.0
    %338 = vmatprep.subr.mxu0 0.0
    %339 = vmatpush1.msra.mxu0 0.0
    %340 = vmatprep.subr.mxu0 0.0
    %341 = vmatpush1.msra.mxu0 0.0
    %342 = vmatprep.subr.mxu0 0.0
    %343 = vmatpush1.msra.mxu0 0.0
    %344 = vmatprep.subr.mxu0 0.0
    %345 = vmatpush1.msra.mxu0 0.0
    %346 = vmatprep.subr.mxu0 0.0
    %347 = vmatpush1.msra.mxu0 0.0
    %348 = vmatprep.subr.mxu0 0.0
    %349 = vmatpush1.msra.mxu0 0.0
    %350 = vmatprep.subr.mxu0 0.0
    %351 = vmatpush1.msra.mxu0 0.0
    %352 = vmatprep.subr.mxu0 0.0
    %353 = vmatpush1.msra.mxu0 0.0
    %354 = vmatprep.subr.mxu0 0.0
    %355 = vmatpush1.msra.mxu0 0.0
    %356 = vmatprep.subr.mxu0 0.0
    %357 = vmatpush1.msra.mxu0 0.0
    %358 = vmatprep.subr.mxu0 0.0
    %359 = vmatpush1.msra.mxu0 0.0
    %360 = vmatprep.subr.mxu0 0.0
    %361 = vmatpush1.msra.mxu0 0.0
    %362 = vmatprep.subr.mxu0 0.0
    %363 = vmatpush1.msra.mxu0 0.0
    %364 = vmatprep.subr.mxu0 0.0
    %365 = vmatpush1.msra.mxu0 0.0
    %366 = vmatprep.mubr.f32.mxu0 0.0
    %367 = vmatmul.mubr.f32.gmra.mrb[0].mxu0 %v278
    %v368 = vpop.f32.mrb[0].mxu0
    %v369 = vadd.f32 %v300, %v368
    %v370 = vpop.f32.mrb[0].mxu0
    %371 = vdwg.mxu0
    %v372 = vmax.f32 %v369, 0.0
    %v373 = vld [vmem:[#allocation8] sm:$0xff]
    %v374 = vld [vmem:[#allocation8 + $0x8] sm:$0xff]
    %v375 = vld [vmem:[#allocation8 + $0x10] sm:$0xff]
    %v376 = vld [vmem:[#allocation8 + $0x18] sm:$0xff]
    %v377 = vld [vmem:[#allocation8 + $0x20] sm:$0xff]
    %v378 = vld [vmem:[#allocation8 + $0x28] sm:$0xff]
    %v379 = vld [vmem:[#allocation8 + $0x30] sm:$0xff]
    %v380 = vld [vmem:[#allocation8 + $0x38] sm:$0xff]
    %v381 = vld [vmem:[#allocation8 + $0x40] sm:$0xff]
    %v382 = vld [vmem:[#allocation8 + $0x48] sm:$0xff]
    %v383 = vld [vmem:[#allocation8 + $0x50] sm:$0xff]
    %v384 = vld [vmem:[#allocation8 + $0x58] sm:$0xff]
    %v385 = vld [vmem:[#allocation8 + $0x60] sm:$0xff]
    %v386 = vld [vmem:[#allocation8 + $0x68] sm:$0xff]
    %v387 = vld [vmem:[#allocation8 + $0x70] sm:$0xff]
    %v388 = vld [vmem:[#allocation8 + $0x78] sm:$0xff]
    %v389 = vld [vmem:[%s8] sm:$0x1]
    %v391 = vlaneseq
    %v392 = vshrl.u32 %v391, 7
    %v393 = vsub.s32 0, %v392
    %v394 = vrot.slane %v389, %v393
    %396 = vmatprep.subr.mxu0 0.0
    %397 = vmatpush1.msra.mxu0 %v373
    %398 = vmatprep.subr.mxu0 0.0
    %399 = vmatpush1.msra.mxu0 %v374
    %400 = vmatprep.subr.mxu0 0.0
    %401 = vmatpush1.msra.mxu0 %v375
    %402 = vmatprep.subr.mxu0 0.0
    %403 = vmatpush1.msra.mxu0 %v376
    %404 = vmatprep.subr.mxu0 0.0
    %405 = vmatpush1.msra.mxu0 %v377
    %406 = vmatprep.subr.mxu0 0.0
    %407 = vmatpush1.msra.mxu0 %v378
    %408 = vmatprep.subr.mxu0 0.0
    %409 = vmatpush1.msra.mxu0 %v379
    %410 = vmatprep.subr.mxu0 0.0
    %411 = vmatpush1.msra.mxu0 %v380
    %412 = vmatprep.subr.mxu0 0.0
    %413 = vmatpush1.msra.mxu0 %v381
    %414 = vmatprep.subr.mxu0 0.0
    %415 = vmatpush1.msra.mxu0 %v382
    %416 = vmatprep.subr.mxu0 0.0
    %417 = vmatpush1.msra.mxu0 %v383
    %418 = vmatprep.subr.mxu0 0.0
    %419 = vmatpush1.msra.mxu0 %v384
    %420 = vmatprep.subr.mxu0 0.0
    %421 = vmatpush1.msra.mxu0 %v385
    %422 = vmatprep.subr.mxu0 0.0
    %423 = vmatpush1.msra.mxu0 %v386
    %424 = vmatprep.subr.mxu0 0.0
    %425 = vmatpush1.msra.mxu0 %v387
    %426 = vmatprep.subr.mxu0 0.0
    %427 = vmatpush1.msra.mxu0 %v388
    %428 = vmatprep.subr.mxu0 0.0
    %429 = vmatpush1.msra.mxu0 0.0
    %430 = vmatprep.subr.mxu0 0.0
    %431 = vmatpush1.msra.mxu0 0.0
    %432 = vmatprep.subr.mxu0 0.0
    %433 = vmatpush1.msra.mxu0 0.0
    %434 = vmatprep.subr.mxu0 0.0
    %435 = vmatpush1.msra.mxu0 0.0
    %436 = vmatprep.subr.mxu0 0.0
    %437 = vmatpush1.msra.mxu0 0.0
    %438 = vmatprep.subr.mxu0 0.0
    %439 = vmatpush1.msra.mxu0 0.0
    %440 = vmatprep.subr.mxu0 0.0
    %441 = vmatpush1.msra.mxu0 0.0
    %442 = vmatprep.subr.mxu0 0.0
    %443 = vmatpush1.msra.mxu0 0.0
    %444 = vmatprep.subr.mxu0 0.0
    %445 = vmatpush1.msra.mxu0 0.0
    %446 = vmatprep.subr.mxu0 0.0
    %447 = vmatpush1.msra.mxu0 0.0
    %448 = vmatprep.subr.mxu0 0.0
    %449 = vmatpush1.msra.mxu0 0.0
    %450 = vmatprep.subr.mxu0 0.0
    %451 = vmatpush1.msra.mxu0 0.0
    %452 = vmatprep.subr.mxu0 0.0
    %453 = vmatpush1.msra.mxu0 0.0
    %454 = vmatprep.subr.mxu0 0.0
    %455 = vmatpush1.msra.mxu0 0.0
    %456 = vmatprep.subr.mxu0 0.0
    %457 = vmatpush1.msra.mxu0 0.0
    %458 = vmatprep.subr.mxu0 0.0
    %459 = vmatpush1.msra.mxu0 0.0
    %460 = vmatprep.mubr.f32.mxu0 0.0
    %461 = vmatmul.mubr.f32.gmra.mrb[0].mxu0 %v372
    %v462 = vpop.f32.mrb[0].mxu0
    %v463 = vadd.f32 %v394, %v462
    %v464 = vpop.f32.mrb[0].mxu0
    %465 = vdwg.mxu0
    %vm466 = vcmask 7168
    %467 = vst.msk [vmem:[%s10] sm:$0xff] %vm466, %v463
    // Predicated region
    $region54: #{_forward.1} parent=1 // pred_check
      _
    $region55: #{_forward.1} parent=1 // pred_check_branch
      %469 = sbr.rel (0) target = $region57
    $region56: #{_forward.1} parent=1 // pred_region
      %s471 = ssub.s32 128, 128
      %472 = vsyncadd [#allocation4], %s471
      %s474 = sshll.u32 [#allocation10], 4
      %s475 = int_to_ptr.vmem [resolvable:$true] %s474
      %477 = dma.vmem_to_hbm [thread:$0]  %s475, 128, %s9, [#allocation4]
    $region57: #{_forward.1} parent=1 // pred_fallthru
      _
    // Predicated region
    $region58: #{_forward.1} parent=1 // pred_check
      _
    $region59: #{_forward.1} parent=1 // pred_check_branch
      %479 = sbr.rel (0) target = $region61
    $region60: #{_forward.1} parent=1 // pred_region
      _
    $region61: #{_forward.1} parent=1 // pred_fallthru
      _
    // Predicated region
    $region62: #{_forward.1} parent=1 // pred_check
      _
    $region63: #{_forward.1} parent=1 // pred_check_branch
      %481 = sbr.rel (0) target = $region65
    $region64: #{_forward.1} parent=1 // pred_region
      %482 = dma.done [#allocation4], 128
    $region65: #{_forward.1} parent=1 // pred_fallthru
      _
    // Predicated region
    $region66: #{_forward.1} parent=1 // pred_check
      _
    $region67: #{_forward.1} parent=1 // pred_check_branch
      %484 = sbr.rel (0) target = $region69
    $region68: #{_forward.1} parent=1 // pred_region
      _
    $region69: #{_forward.1} parent=1 // pred_fallthru
      _
    %485 = vsyncpa [#allocation3], 1
    %486 = vsyncpa [#allocation6], 1
    %487 = vsyncpa [#allocation9], 1
    %488 = vsyncpa [#allocation4], 1

</llo_original>
